<compile_context>
chip_gen: v5e
topology: v5e:2x2
jax: 0.10.0
libtpu: 0.0.40
codegen_flags: <defaults>
</compile_context>

<pallas_src>
import math

import jax
import jax.numpy as jnp
from jax.experimental import pallas as pl
from jax.experimental.pallas import tpu as pltpu


# ----------------------------------------------------------------------------
# Pallas kernel: one invocation processes the entire sequence.
# ----------------------------------------------------------------------------
def rnn_network_kernel(
    x_ref,      # (T*B, In)    flattened input sequence
    w1t_ref,    # (In, H)      first linear weight, pre-transposed
    b1_ref,     # (1, H)       first linear bias
    wiht_ref,   # (L, H, 3H)   GRU input->hidden weights, pre-transposed, gates r|z|n
    whht_ref,   # (L, H, 3H)   GRU hidden->hidden weights, pre-transposed, gates r|z|n
    bgi_ref,    # (L, 1, 3H)   [b_ir+b_hr, b_iz+b_hz, b_in]  (pre-summed r/z biases)
    bhn_ref,    # (L, 1, H)    b_hn (stays inside r * (.))
    wft_ref,    # (H, Opad)    final linear weight, pre-transposed, zero-padded lanes
    bf_ref,     # (1, Opad)    final linear bias, zero-padded lanes
    h0_ref,     # (L, B, H)    initial hidden state
    y_ref,      # (T*B, Opad)  output (flattened over time, lane-dense)
    hout_ref,   # (L, B, H)    final hidden state
    gi0_scr,    # (T*B, 3H)    VMEM scratch: layer-0 input-side gate projection
    out_scr,    # (T*B, H)     VMEM scratch: last layer's feature sequence
):
    L, B, H = h0_ref.shape
    TB = x_ref.shape[0]
    T = TB // B
    H2, H3 = 2 * H, 3 * H

    def mm(a, b):  # f32 MXU matmul, f32 accumulation
        return jnp.dot(a, b, preferred_element_type=jnp.float32)

    # --- batched prologue -----------------------------------------------------
    # First Linear + ReLU over all timesteps, then layer 0's input-side gate
    # projection for the whole sequence.  Parked in VMEM scratch so the unrolled
    # wavefront only holds one (B, 3H) slice live at a time.
    feat0 = jnp.maximum(mm(x_ref[...], w1t_ref[...]) + b1_ref[...], 0.0)
    gi0_scr[...] = mm(feat0, wiht_ref[0]) + bgi_ref[0]

    # --- hoisted per-layer constants (loaded / broadcast once, not per step) ---
    whh = [whht_ref[l] for l in range(L)]                                  # (H, 3H)
    wih1 = [wiht_ref[l] for l in range(1, L)]                              # (H, 3H)
    bgi1 = [jnp.broadcast_to(bgi_ref[l], (B, H3)) for l in range(1, L)]    # (B, 3H)
    bhn_b = [jnp.broadcast_to(bhn_ref[l], (B, H)) for l in range(L)]       # (B, H)

    h_prev = [h0_ref[l] for l in range(L)]   # recurrent carries, one (B, H) each
    feed = [None] * L                        # feed[l]: layer l's output at its latest t

    # --- wavefront over (t, l): cell (t, l) runs at step s = t + l -------------
    # Dependency depth T + L - 1 instead of L * T.  Layers are visited high->low
    # inside a step so feed[l-1] still holds step s-1's value when layer l reads it.
    # NOTE: gate slices below cut inside one 128-lane tile (H=32); fine while the
    # XLU/VPU slots have slack — pad gates to 128 lanes if H ever scales.
    for s in range(T + L - 1):
        for l in range(L - 1, -1, -1):
            t = s - l
            if not (0 <= t < T):
                continue
            if l == 0:
                gi_t = gi0_scr[t * B:(t + 1) * B, :]                  # precomputed
            else:
                gi_t = mm(feed[l - 1], wih1[l - 1]) + bgi1[l - 1]     # (B, 3H)
            gh = mm(h_prev[l], whh[l])                                # (B, 3H), 1 push
            r = jax.nn.sigmoid(gi_t[:, 0:H] + gh[:, 0:H])
            z = jax.nn.sigmoid(gi_t[:, H:H2] + gh[:, H:H2])
            n = jnp.tanh(gi_t[:, H2:H3] + r * (gh[:, H2:H3] + bhn_b[l]))
            h_new = (1.0 - z) * n + z * h_prev[l]
            h_prev[l] = h_new
            if l == L - 1:
                out_scr[t * B:(t + 1) * B, :] = h_new   # final GRU output sequence
            else:
                feed[l] = h_new                          # consumed at step s + 1

    for l in range(L):
        hout_ref[l] = h_prev[l]                          # written once per layer

    # --- batched epilogue: final Linear (final_activation=None), lane-dense ----
    y_ref[...] = (mm(out_scr[...], wft_ref[...]) + bf_ref[...]).astype(y_ref.dtype)


# ----------------------------------------------------------------------------
# Wrapper: one-time layout plumbing (transpose / gate fusion / bias pre-sum /
# lane padding), then a single pallas_call over the whole sequence.
# ----------------------------------------------------------------------------
def rnn_network_forward(x, h, params):
    """Pallas implementation of RNNNetwork.forward(x, h). Returns (y, h_new)."""
    T, B, In = x.shape
    L = params["wih"].shape[0]
    H = params["wih"].shape[2]
    O = params["wf"].shape[0]
    O_pad = ((O + 127) // 128) * 128   # lane-dense output width

    if h is None:
        h = jnp.zeros((L, B, H), jnp.float32)   # init_hiddens equivalent

    # Pre-transpose weights (contraction dim first) and fuse the 3 gates per
    # direction into one (H, 3H) matrix with gate order r | z | n.
    w1t = params["w1"].T                                                    # (In, H)
    wiht = jnp.transpose(params["wih"], (0, 3, 1, 2)).reshape(L, H, 3 * H)  # (L, H, 3H)
    whht = jnp.transpose(params["whh"], (0, 3, 1, 2)).reshape(L, H, 3 * H)  # (L, H, 3H)

    bih, bhh = params["bih"], params["bhh"]                                 # (L, 3, 1, H)
    bgi = jnp.concatenate(
        [bih[:, 0] + bhh[:, 0], bih[:, 1] + bhh[:, 1], bih[:, 2]], axis=-1
    )                                                                       # (L, 1, 3H)
    bhn = bhh[:, 2]                                                         # (L, 1, H)

    # Zero-pad the final projection to a 128-lane multiple so the epilogue store
    # is an unmasked, lane-dense vst; padded columns are sliced off outside.
    wft = jnp.zeros((H, O_pad), jnp.float32).at[:, :O].set(params["wf"].T)  # (H, Opad)
    bf = jnp.zeros((1, O_pad), jnp.float32).at[:, :O].set(params["bf"])     # (1, Opad)

    x2d = x.reshape(T * B, In)

    y2d, h_new = pl.pallas_call(
        rnn_network_kernel,
        out_shape=(
            jax.ShapeDtypeStruct((T * B, O_pad), jnp.float32),
            jax.ShapeDtypeStruct((L, B, H), jnp.float32),
        ),
        # No grid: whole problem fits comfortably in VMEM; all operands are
        # whole-array VMEM blocks, so there is no per-timestep pipeline overhead.
        scratch_shapes=[
            pltpu.VMEM((T * B, 3 * H), jnp.float32),   # layer-0 gi projection
            pltpu.VMEM((T * B, H), jnp.float32),       # last layer's outputs
        ],
    )(x2d, w1t, params["b1"], wiht, whht, bgi, bhn, wft, bf, h)

    return y2d[:, :O].reshape(T, B, O), h_new


# ----------------------------------------------------------------------------
# Pure-JAX reference (mirrors PyTorch nn.GRU equations) for validation.
# Uses HIGHEST matmul precision so the f32 comparison is meaningful.
# ----------------------------------------------------------------------------
def reference_forward(x, h, p):
    hi = jax.lax.Precision.HIGHEST
    mm = lambda a, b: jnp.dot(a, b, precision=hi)
    sig = jax.nn.sigmoid
    T = x.shape[0]
    L = p["wih"].shape[0]
    xs = jax.nn.relu(jnp.einsum("tbi,hi->tbh", x, p["w1"], precision=hi) + p["b1"][0])
    ys = []
    for t in range(T):
        cur = xs[t]
        new_h = []
        for l in range(L):
            hp = h[l]
            gi_r = mm(cur, p["wih"][l, 0].T) + p["bih"][l, 0, 0]
            gi_z = mm(cur, p["wih"][l, 1].T) + p["bih"][l, 1, 0]
            gi_n = mm(cur, p["wih"][l, 2].T) + p["bih"][l, 2, 0]
            gh_r = mm(hp, p["whh"][l, 0].T) + p["bhh"][l, 0, 0]
            gh_z = mm(hp, p["whh"][l, 1].T) + p["bhh"][l, 1, 0]
            gh_n = mm(hp, p["whh"][l, 2].T) + p["bhh"][l, 2, 0]
            r = sig(gi_r + gh_r)
            z = sig(gi_z + gh_z)
            n = jnp.tanh(gi_n + r * gh_n)
            hn = (1.0 - z) * n + z * hp
            new_h.append(hn)
            cur = hn
        h = jnp.stack(new_h)
        ys.append(mm(cur, p["wf"].T) + p["bf"][0])
    return jnp.stack(ys), h


# ----------------------------------------------------------------------------
# Deterministic parameter construction (synthetic; mirrors module __init__ shapes)
# ----------------------------------------------------------------------------
def make_params(key, input_size, hidden_size, num_layers, output_size):
    keys = jax.random.split(key, 9)
    H, In, O, L = hidden_size, input_size, output_size, num_layers
    scale = 1.0 / math.sqrt(H)
    params = {
        # first Linear(In -> H)
        "w1": jax.random.uniform(keys[0], (H, In), jnp.float32, -scale, scale),
        "b1": jnp.zeros((1, H), jnp.float32),
        # GRU stacks: (L, 3[gates r,z,n], H, H) and biases (L, 3, 1, H)
        "wih": jax.random.uniform(keys[1], (L, 3, H, H), jnp.float32, -scale, scale),
        "whh": jax.random.uniform(keys[2], (L, 3, H, H), jnp.float32, -scale, scale),
        "bih": jax.random.uniform(keys[3], (L, 3, 1, H), jnp.float32, -scale, scale),
        "bhh": jax.random.uniform(keys[4], (L, 3, 1, H), jnp.float32, -scale, scale),
        # final Linear(H -> O): orthogonal init with gain sqrt(2), zero bias
        "wf": jax.nn.initializers.orthogonal(scale=math.sqrt(2.0))(
            keys[5], (O, H), jnp.float32
        ),
        "bf": jnp.zeros((1, O), jnp.float32),
    }
    return params


if __name__ == "__main__":
    # dims = [12, 32, 32, 32, 5]  ->  input=12, GRU(hidden=32, num_layers=2), output=5
    SEQ, BATCH, IN, HID, LAYERS, OUT = 8, 8, 12, 32, 2, 5

    key = jax.random.PRNGKey(0)
    k_param, k_x, k_h = jax.random.split(key, 3)

    params = make_params(k_param, IN, HID, LAYERS, OUT)
    x = jax.random.normal(k_x, (SEQ, BATCH, IN), jnp.float32)
    h0 = jax.random.normal(k_h, (LAYERS, BATCH, HID), jnp.float32) * 0.1

    y, h_new = rnn_network_forward(x, h0, params)
    y = jax.block_until_ready(y)
    h_new = jax.block_until_ready(h_new)

    # Validate against a pure-JAX reference of the PyTorch semantics (tight f32 tol).
    y_ref, h_ref = reference_forward(x, h0, params)
    assert y.shape == (SEQ, BATCH, OUT) and h_new.shape == (LAYERS, BATCH, HID)
    assert jnp.allclose(y, y_ref, rtol=1e-4, atol=1e-5), "output mismatch"
    assert jnp.allclose(h_new, h_ref, rtol=1e-4, atol=1e-5), "hidden mismatch"

    print("KERNEL_OK")
</pallas_src>

<mosaic_0001>
module attributes {stable_mosaic.version = 11 : i64} {
  func.func @rnn_network_kernel(%arg0: memref<64x12xf32, #tpu.memory_space<vmem>>, %arg1: memref<12x32xf32, #tpu.memory_space<vmem>>, %arg2: memref<1x32xf32, #tpu.memory_space<vmem>>, %arg3: memref<2x32x96xf32, #tpu.memory_space<vmem>>, %arg4: memref<2x32x96xf32, #tpu.memory_space<vmem>>, %arg5: memref<2x1x96xf32, #tpu.memory_space<vmem>>, %arg6: memref<2x1x32xf32, #tpu.memory_space<vmem>>, %arg7: memref<32x128xf32, #tpu.memory_space<vmem>>, %arg8: memref<1x128xf32, #tpu.memory_space<vmem>>, %arg9: memref<2x8x32xf32, #tpu.memory_space<vmem>>, %arg10: memref<64x128xf32, #tpu.memory_space<vmem>>, %arg11: memref<2x8x32xf32, #tpu.memory_space<vmem>>, %arg12: memref<64x96xf32, #tpu.memory_space<vmem>>, %arg13: memref<64x32xf32, #tpu.memory_space<vmem>>) attributes {dimension_semantics = [], scalar_prefetch = 0 : i64, scratch_operands = 2 : i64, tpu.core_type = #tpu.core_type<tc>} {
    %c0 = arith.constant 0 : index
    %c0_0 = arith.constant 0 : index
    %0 = vector.load %arg0[%c0, %c0_0] : memref<64x12xf32, #tpu.memory_space<vmem>>, vector<64x12xf32>
    %c0_1 = arith.constant 0 : index
    %c0_2 = arith.constant 0 : index
    %1 = vector.load %arg1[%c0_1, %c0_2] : memref<12x32xf32, #tpu.memory_space<vmem>>, vector<12x32xf32>
    %cst = arith.constant dense<0.000000e+00> : vector<64x32xf32>
    %2 = tpu.matmul %0, %1, %cst {dimension_numbers = #tpu.dot_dimension_numbers<[1], [0], [0], [1], [0, 0, 1, 1], [], []>} : vector<64x12xf32>, vector<12x32xf32>, vector<64x32xf32> -> vector<64x32xf32>
    %c0_3 = arith.constant 0 : index
    %c0_4 = arith.constant 0 : index
    %3 = vector.load %arg2[%c0_3, %c0_4] : memref<1x32xf32, #tpu.memory_space<vmem>>, vector<1x32xf32>
    %4 = vector.broadcast %3 : vector<1x32xf32> to vector<64x32xf32>
    %5 = arith.addf %2, %4 : vector<64x32xf32>
    %cst_5 = arith.constant 0.000000e+00 : f32
    %6 = vector.broadcast %cst_5 : f32 to vector<64x32xf32>
    %7 = arith.maximumf %5, %6 : vector<64x32xf32>
    %c0_6 = arith.constant 0 : index
    %c0_7 = arith.constant 0 : index
    %c0_8 = arith.constant 0 : index
    %8 = vector.load %arg3[%c0_6, %c0_7, %c0_8] : memref<2x32x96xf32, #tpu.memory_space<vmem>>, vector<1x32x96xf32>
    %9 = vector.shape_cast %8 : vector<1x32x96xf32> to vector<32x96xf32>
    %cst_9 = arith.constant dense<0.000000e+00> : vector<64x96xf32>
    %10 = tpu.matmul %7, %9, %cst_9 {dimension_numbers = #tpu.dot_dimension_numbers<[1], [0], [0], [1], [0, 0, 1, 1], [], []>} : vector<64x32xf32>, vector<32x96xf32>, vector<64x96xf32> -> vector<64x96xf32>
    %c0_10 = arith.constant 0 : index
    %c0_11 = arith.constant 0 : index
    %c0_12 = arith.constant 0 : index
    %11 = vector.load %arg5[%c0_10, %c0_11, %c0_12] : memref<2x1x96xf32, #tpu.memory_space<vmem>>, vector<1x1x96xf32>
    %12 = vector.shape_cast %11 : vector<1x1x96xf32> to vector<1x96xf32>
    %13 = vector.broadcast %12 : vector<1x96xf32> to vector<64x96xf32>
    %14 = arith.addf %10, %13 : vector<64x96xf32>
    %c0_13 = arith.constant 0 : index
    %c0_14 = arith.constant 0 : index
    %15 = vector.load %arg12[%c0_13, %c0_14] : memref<64x96xf32, #tpu.memory_space<vmem>>, vector<64x96xf32>
    tpu.vector_store %arg12[%c0_13, %c0_14], %14 {strides = array<i32>} : memref<64x96xf32, #tpu.memory_space<vmem>>, vector<64x96xf32>,
    %c0_15 = arith.constant 0 : index
    %c0_16 = arith.constant 0 : index
    %c0_17 = arith.constant 0 : index
    %16 = vector.load %arg4[%c0_15, %c0_16, %c0_17] : memref<2x32x96xf32, #tpu.memory_space<vmem>>, vector<1x32x96xf32>
    %17 = vector.shape_cast %16 : vector<1x32x96xf32> to vector<32x96xf32>
    %c1 = arith.constant 1 : index
    %c0_18 = arith.constant 0 : index
    %c0_19 = arith.constant 0 : index
    %18 = vector.load %arg4[%c1, %c0_18, %c0_19] : memref<2x32x96xf32, #tpu.memory_space<vmem>>, vector<1x32x96xf32>
    %19 = vector.shape_cast %18 : vector<1x32x96xf32> to vector<32x96xf32>
    %c1_20 = arith.constant 1 : index
    %c0_21 = arith.constant 0 : index
    %c0_22 = arith.constant 0 : index
    %20 = vector.load %arg3[%c1_20, %c0_21, %c0_22] : memref<2x32x96xf32, #tpu.memory_space<vmem>>, vector<1x32x96xf32>
    %21 = vector.shape_cast %20 : vector<1x32x96xf32> to vector<32x96xf32>
    %c1_23 = arith.constant 1 : index
    %c0_24 = arith.constant 0 : index
    %c0_25 = arith.constant 0 : index
    %22 = vector.load %arg5[%c1_23, %c0_24, %c0_25] : memref<2x1x96xf32, #tpu.memory_space<vmem>>, vector<1x1x96xf32>
    %23 = vector.shape_cast %22 : vector<1x1x96xf32> to vector<1x96xf32>
    %24 = vector.shape_cast %23 : vector<1x96xf32> to vector<1x96xf32>
    %25 = vector.broadcast %24 : vector<1x96xf32> to vector<8x96xf32>
    %c0_26 = arith.constant 0 : index
    %c0_27 = arith.constant 0 : index
    %c0_28 = arith.constant 0 : index
    %26 = vector.load %arg6[%c0_26, %c0_27, %c0_28] : memref<2x1x32xf32, #tpu.memory_space<vmem>>, vector<1x1x32xf32>
    %27 = vector.shape_cast %26 : vector<1x1x32xf32> to vector<1x32xf32>
    %28 = vector.shape_cast %27 : vector<1x32xf32> to vector<1x32xf32>
    %29 = vector.broadcast %28 : vector<1x32xf32> to vector<8x32xf32>
    %c1_29 = arith.constant 1 : index
    %c0_30 = arith.constant 0 : index
    %c0_31 = arith.constant 0 : index
    %30 = vector.load %arg6[%c1_29, %c0_30, %c0_31] : memref<2x1x32xf32, #tpu.memory_space<vmem>>, vector<1x1x32xf32>
    %31 = vector.shape_cast %30 : vector<1x1x32xf32> to vector<1x32xf32>
    %32 = vector.shape_cast %31 : vector<1x32xf32> to vector<1x32xf32>
    %33 = vector.broadcast %32 : vector<1x32xf32> to vector<8x32xf32>
    %c0_32 = arith.constant 0 : index
    %c0_33 = arith.constant 0 : index
    %c0_34 = arith.constant 0 : index
    %34 = vector.load %arg9[%c0_32, %c0_33, %c0_34] : memref<2x8x32xf32, #tpu.memory_space<vmem>>, vector<1x8x32xf32>
    %35 = vector.shape_cast %34 : vector<1x8x32xf32> to vector<8x32xf32>
    %c1_35 = arith.constant 1 : index
    %c0_36 = arith.constant 0 : index
    %c0_37 = arith.constant 0 : index
    %36 = vector.load %arg9[%c1_35, %c0_36, %c0_37] : memref<2x8x32xf32, #tpu.memory_space<vmem>>, vector<1x8x32xf32>
    %37 = vector.shape_cast %36 : vector<1x8x32xf32> to vector<8x32xf32>
    %c0_38 = arith.constant 0 : index
    %c0_39 = arith.constant 0 : index
    %38 = vector.load %arg12[%c0_38, %c0_39] : memref<64x96xf32, #tpu.memory_space<vmem>>, vector<8x96xf32>
    %cst_40 = arith.constant dense<0.000000e+00> : vector<8x96xf32>
    %39 = tpu.matmul %35, %17, %cst_40 {dimension_numbers = #tpu.dot_dimension_numbers<[1], [0], [0], [1], [0, 0, 1, 1], [], []>} : vector<8x32xf32>, vector<32x96xf32>, vector<8x96xf32> -> vector<8x96xf32>
    %40 = vector.extract_strided_slice %38 {offsets = [0, 0], sizes = [8, 32], strides = [1, 1]} : vector<8x96xf32> to vector<8x32xf32>
    %41 = vector.extract_strided_slice %39 {offsets = [0, 0], sizes = [8, 32], strides = [1, 1]} : vector<8x96xf32> to vector<8x32xf32>
    %42 = arith.addf %40, %41 : vector<8x32xf32>
    %43 = arith.negf %42 : vector<8x32xf32>
    %44 = math.exp %43 : vector<8x32xf32>
    %cst_41 = arith.constant 1.000000e+00 : f32
    %45 = vector.broadcast %cst_41 : f32 to vector<8x32xf32>
    %46 = arith.addf %45, %44 : vector<8x32xf32>
    %47 = arith.divf %45, %46 : vector<8x32xf32>
    %48 = vector.extract_strided_slice %38 {offsets = [0, 32], sizes = [8, 32], strides = [1, 1]} : vector<8x96xf32> to vector<8x32xf32>
    %49 = vector.extract_strided_slice %39 {offsets = [0, 32], sizes = [8, 32], strides = [1, 1]} : vector<8x96xf32> to vector<8x32xf32>
    %50 = arith.addf %48, %49 : vector<8x32xf32>
    %51 = arith.negf %50 : vector<8x32xf32>
    %52 = math.exp %51 : vector<8x32xf32>
    %cst_42 = arith.constant 1.000000e+00 : f32
    %53 = vector.broadcast %cst_42 : f32 to vector<8x32xf32>
    %54 = arith.addf %53, %52 : vector<8x32xf32>
    %55 = arith.divf %53, %54 : vector<8x32xf32>
    %56 = vector.extract_strided_slice %38 {offsets = [0, 64], sizes = [8, 32], strides = [1, 1]} : vector<8x96xf32> to vector<8x32xf32>
    %57 = vector.extract_strided_slice %39 {offsets = [0, 64], sizes = [8, 32], strides = [1, 1]} : vector<8x96xf32> to vector<8x32xf32>
    %58 = arith.addf %57, %29 : vector<8x32xf32>
    %59 = arith.mulf %47, %58 : vector<8x32xf32>
    %60 = arith.addf %56, %59 : vector<8x32xf32>
    %61 = math.tanh %60 : vector<8x32xf32>
    %cst_43 = arith.constant 1.000000e+00 : f32
    %62 = vector.broadcast %cst_43 : f32 to vector<8x32xf32>
    %63 = arith.subf %62, %55 : vector<8x32xf32>
    %64 = arith.mulf %63, %61 : vector<8x32xf32>
    %65 = arith.mulf %55, %35 : vector<8x32xf32>
    %66 = arith.addf %64, %65 : vector<8x32xf32>
    %cst_44 = arith.constant dense<0.000000e+00> : vector<8x96xf32>
    %67 = tpu.matmul %66, %21, %cst_44 {dimension_numbers = #tpu.dot_dimension_numbers<[1], [0], [0], [1], [0, 0, 1, 1], [], []>} : vector<8x32xf32>, vector<32x96xf32>, vector<8x96xf32> -> vector<8x96xf32>
    %68 = arith.addf %67, %25 : vector<8x96xf32>
    %cst_45 = arith.constant dense<0.000000e+00> : vector<8x96xf32>
    %69 = tpu.matmul %37, %19, %cst_45 {dimension_numbers = #tpu.dot_dimension_numbers<[1], [0], [0], [1], [0, 0, 1, 1], [], []>} : vector<8x32xf32>, vector<32x96xf32>, vector<8x96xf32> -> vector<8x96xf32>
    %70 = vector.extract_strided_slice %68 {offsets = [0, 0], sizes = [8, 32], strides = [1, 1]} : vector<8x96xf32> to vector<8x32xf32>
    %71 = vector.extract_strided_slice %69 {offsets = [0, 0], sizes = [8, 32], strides = [1, 1]} : vector<8x96xf32> to vector<8x32xf32>
    %72 = arith.addf %70, %71 : vector<8x32xf32>
    %73 = arith.negf %72 : vector<8x32xf32>
    %74 = math.exp %73 : vector<8x32xf32>
    %cst_46 = arith.constant 1.000000e+00 : f32
    %75 = vector.broadcast %cst_46 : f32 to vector<8x32xf32>
    %76 = arith.addf %75, %74 : vector<8x32xf32>
    %77 = arith.divf %75, %76 : vector<8x32xf32>
    %78 = vector.extract_strided_slice %68 {offsets = [0, 32], sizes = [8, 32], strides = [1, 1]} : vector<8x96xf32> to vector<8x32xf32>
    %79 = vector.extract_strided_slice %69 {offsets = [0, 32], sizes = [8, 32], strides = [1, 1]} : vector<8x96xf32> to vector<8x32xf32>
    %80 = arith.addf %78, %79 : vector<8x32xf32>
    %81 = arith.negf %80 : vector<8x32xf32>
    %82 = math.exp %81 : vector<8x32xf32>
    %cst_47 = arith.constant 1.000000e+00 : f32
    %83 = vector.broadcast %cst_47 : f32 to vector<8x32xf32>
    %84 = arith.addf %83, %82 : vector<8x32xf32>
    %85 = arith.divf %83, %84 : vector<8x32xf32>
    %86 = vector.extract_strided_slice %68 {offsets = [0, 64], sizes = [8, 32], strides = [1, 1]} : vector<8x96xf32> to vector<8x32xf32>
    %87 = vector.extract_strided_slice %69 {offsets = [0, 64], sizes = [8, 32], strides = [1, 1]} : vector<8x96xf32> to vector<8x32xf32>
    %88 = arith.addf %87, %33 : vector<8x32xf32>
    %89 = arith.mulf %77, %88 : vector<8x32xf32>
    %90 = arith.addf %86, %89 : vector<8x32xf32>
    %91 = math.tanh %90 : vector<8x32xf32>
    %cst_48 = arith.constant 1.000000e+00 : f32
    %92 = vector.broadcast %cst_48 : f32 to vector<8x32xf32>
    %93 = arith.subf %92, %85 : vector<8x32xf32>
    %94 = arith.mulf %93, %91 : vector<8x32xf32>
    %95 = arith.mulf %85, %37 : vector<8x32xf32>
    %96 = arith.addf %94, %95 : vector<8x32xf32>
    %c0_49 = arith.constant 0 : index
    %c0_50 = arith.constant 0 : index
    %97 = vector.load %arg13[%c0_49, %c0_50] : memref<64x32xf32, #tpu.memory_space<vmem>>, vector<8x32xf32>
    tpu.vector_store %arg13[%c0_49, %c0_50], %96 {strides = array<i32>} : memref<64x32xf32, #tpu.memory_space<vmem>>, vector<8x32xf32>,
    %c8 = arith.constant 8 : index
    %c0_51 = arith.constant 0 : index
    %98 = vector.load %arg12[%c8, %c0_51] : memref<64x96xf32, #tpu.memory_space<vmem>>, vector<8x96xf32>
    %cst_52 = arith.constant dense<0.000000e+00> : vector<8x96xf32>
    %99 = tpu.matmul %66, %17, %cst_52 {dimension_numbers = #tpu.dot_dimension_numbers<[1], [0], [0], [1], [0, 0, 1, 1], [], []>} : vector<8x32xf32>, vector<32x96xf32>, vector<8x96xf32> -> vector<8x96xf32>
    %100 = vector.extract_strided_slice %98 {offsets = [0, 0], sizes = [8, 32], strides = [1, 1]} : vector<8x96xf32> to vector<8x32xf32>
    %101 = vector.extract_strided_slice %99 {offsets = [0, 0], sizes = [8, 32], strides = [1, 1]} : vector<8x96xf32> to vector<8x32xf32>
    %102 = arith.addf %100, %101 : vector<8x32xf32>
    %103 = arith.negf %102 : vector<8x32xf32>
    %104 = math.exp %103 : vector<8x32xf32>
    %cst_53 = arith.constant 1.000000e+00 : f32
    %105 = vector.broadcast %cst_53 : f32 to vector<8x32xf32>
    %106 = arith.addf %105, %104 : vector<8x32xf32>
    %107 = arith.divf %105, %106 : vector<8x32xf32>
    %108 = vector.extract_strided_slice %98 {offsets = [0, 32], sizes = [8, 32], strides = [1, 1]} : vector<8x96xf32> to vector<8x32xf32>
    %109 = vector.extract_strided_slice %99 {offsets = [0, 32], sizes = [8, 32], strides = [1, 1]} : vector<8x96xf32> to vector<8x32xf32>
    %110 = arith.addf %108, %109 : vector<8x32xf32>
    %111 = arith.negf %110 : vector<8x32xf32>
    %112 = math.exp %111 : vector<8x32xf32>
    %cst_54 = arith.constant 1.000000e+00 : f32
    %113 = vector.broadcast %cst_54 : f32 to vector<8x32xf32>
    %114 = arith.addf %113, %112 : vector<8x32xf32>
    %115 = arith.divf %113, %114 : vector<8x32xf32>
    %116 = vector.extract_strided_slice %98 {offsets = [0, 64], sizes = [8, 32], strides = [1, 1]} : vector<8x96xf32> to vector<8x32xf32>
    %117 = vector.extract_strided_slice %99 {offsets = [0, 64], sizes = [8, 32], strides = [1, 1]} : vector<8x96xf32> to vector<8x32xf32>
    %118 = arith.addf %117, %29 : vector<8x32xf32>
    %119 = arith.mulf %107, %118 : vector<8x32xf32>
    %120 = arith.addf %116, %119 : vector<8x32xf32>
    %121 = math.tanh %120 : vector<8x32xf32>
    %cst_55 = arith.constant 1.000000e+00 : f32
    %122 = vector.broadcast %cst_55 : f32 to vector<8x32xf32>
    %123 = arith.subf %122, %115 : vector<8x32xf32>
    %124 = arith.mulf %123, %121 : vector<8x32xf32>
    %125 = arith.mulf %115, %66 : vector<8x32xf32>
    %126 = arith.addf %124, %125 : vector<8x32xf32>
    %cst_56 = arith.constant dense<0.000000e+00> : vector<8x96xf32>
    %127 = tpu.matmul %126, %21, %cst_56 {dimension_numbers = #tpu.dot_dimension_numbers<[1], [0], [0], [1], [0, 0, 1, 1], [], []>} : vector<8x32xf32>, vector<32x96xf32>, vector<8x96xf32> -> vector<8x96xf32>
    %128 = arith.addf %127, %25 : vector<8x96xf32>
    %cst_57 = arith.constant dense<0.000000e+00> : vector<8x96xf32>
    %129 = tpu.matmul %96, %19, %cst_57 {dimension_numbers = #tpu.dot_dimension_numbers<[1], [0], [0], [1], [0, 0, 1, 1], [], []>} : vector<8x32xf32>, vector<32x96xf32>, vector<8x96xf32> -> vector<8x96xf32>
    %130 = vector.extract_strided_slice %128 {offsets = [0, 0], sizes = [8, 32], strides = [1, 1]} : vector<8x96xf32> to vector<8x32xf32>
    %131 = vector.extract_strided_slice %129 {offsets = [0, 0], sizes = [8, 32], strides = [1, 1]} : vector<8x96xf32> to vector<8x32xf32>
    %132 = arith.addf %130, %131 : vector<8x32xf32>
    %133 = arith.negf %132 : vector<8x32xf32>
    %134 = math.exp %133 : vector<8x32xf32>
    %cst_58 = arith.constant 1.000000e+00 : f32
    %135 = vector.broadcast %cst_58 : f32 to vector<8x32xf32>
    %136 = arith.addf %135, %134 : vector<8x32xf32>
    %137 = arith.divf %135, %136 : vector<8x32xf32>
    %138 = vector.extract_strided_slice %128 {offsets = [0, 32], sizes = [8, 32], strides = [1, 1]} : vector<8x96xf32> to vector<8x32xf32>
    %139 = vector.extract_strided_slice %129 {offsets = [0, 32], sizes = [8, 32], strides = [1, 1]} : vector<8x96xf32> to vector<8x32xf32>
    %140 = arith.addf %138, %139 : vector<8x32xf32>
    %141 = arith.negf %140 : vector<8x32xf32>
    %142 = math.exp %141 : vector<8x32xf32>
    %cst_59 = arith.constant 1.000000e+00 : f32
    %143 = vector.broadcast %cst_59 : f32 to vector<8x32xf32>
    %144 = arith.addf %143, %142 : vector<8x32xf32>
    %145 = arith.divf %143, %144 : vector<8x32xf32>
    %146 = vector.extract_strided_slice %128 {offsets = [0, 64], sizes = [8, 32], strides = [1, 1]} : vector<8x96xf32> to vector<8x32xf32>
    %147 = vector.extract_strided_slice %129 {offsets = [0, 64], sizes = [8, 32], strides = [1, 1]} : vector<8x96xf32> to vector<8x32xf32>
    %148 = arith.addf %147, %33 : vector<8x32xf32>
    %149 = arith.mulf %137, %148 : vector<8x32xf32>
    %150 = arith.addf %146, %149 : vector<8x32xf32>
    %151 = math.tanh %150 : vector<8x32xf32>
    %cst_60 = arith.constant 1.000000e+00 : f32
    %152 = vector.broadcast %cst_60 : f32 to vector<8x32xf32>
    %153 = arith.subf %152, %145 : vector<8x32xf32>
    %154 = arith.mulf %153, %151 : vector<8x32xf32>
    %155 = arith.mulf %145, %96 : vector<8x32xf32>
    %156 = arith.addf %154, %155 : vector<8x32xf32>
    %c8_61 = arith.constant 8 : index
    %c0_62 = arith.constant 0 : index
    %157 = vector.load %arg13[%c8_61, %c0_62] : memref<64x32xf32, #tpu.memory_space<vmem>>, vector<8x32xf32>
    tpu.vector_store %arg13[%c8_61, %c0_62], %156 {strides = array<i32>} : memref<64x32xf32, #tpu.memory_space<vmem>>, vector<8x32xf32>,
    %c16 = arith.constant 16 : index
    %c0_63 = arith.constant 0 : index
    %158 = vector.load %arg12[%c16, %c0_63] : memref<64x96xf32, #tpu.memory_space<vmem>>, vector<8x96xf32>
    %cst_64 = arith.constant dense<0.000000e+00> : vector<8x96xf32>
    %159 = tpu.matmul %126, %17, %cst_64 {dimension_numbers = #tpu.dot_dimension_numbers<[1], [0], [0], [1], [0, 0, 1, 1], [], []>} : vector<8x32xf32>, vector<32x96xf32>, vector<8x96xf32> -> vector<8x96xf32>
    %160 = vector.extract_strided_slice %158 {offsets = [0, 0], sizes = [8, 32], strides = [1, 1]} : vector<8x96xf32> to vector<8x32xf32>
    %161 = vector.extract_strided_slice %159 {offsets = [0, 0], sizes = [8, 32], strides = [1, 1]} : vector<8x96xf32> to vector<8x32xf32>
    %162 = arith.addf %160, %161 : vector<8x32xf32>
    %163 = arith.negf %162 : vector<8x32xf32>
    %164 = math.exp %163 : vector<8x32xf32>
    %cst_65 = arith.constant 1.000000e+00 : f32
    %165 = vector.broadcast %cst_65 : f32 to vector<8x32xf32>
    %166 = arith.addf %165, %164 : vector<8x32xf32>
    %167 = arith.divf %165, %166 : vector<8x32xf32>
    %168 = vector.extract_strided_slice %158 {offsets = [0, 32], sizes = [8, 32], strides = [1, 1]} : vector<8x96xf32> to vector<8x32xf32>
    %169 = vector.extract_strided_slice %159 {offsets = [0, 32], sizes = [8, 32], strides = [1, 1]} : vector<8x96xf32> to vector<8x32xf32>
    %170 = arith.addf %168, %169 : vector<8x32xf32>
    %171 = arith.negf %170 : vector<8x32xf32>
    %172 = math.exp %171 : vector<8x32xf32>
    %cst_66 = arith.constant 1.000000e+00 : f32
    %173 = vector.broadcast %cst_66 : f32 to vector<8x32xf32>
    %174 = arith.addf %173, %172 : vector<8x32xf32>
    %175 = arith.divf %173, %174 : vector<8x32xf32>
    %176 = vector.extract_strided_slice %158 {offsets = [0, 64], sizes = [8, 32], strides = [1, 1]} : vector<8x96xf32> to vector<8x32xf32>
    %177 = vector.extract_strided_slice %159 {offsets = [0, 64], sizes = [8, 32], strides = [1, 1]} : vector<8x96xf32> to vector<8x32xf32>
    %178 = arith.addf %177, %29 : vector<8x32xf32>
    %179 = arith.mulf %167, %178 : vector<8x32xf32>
    %180 = arith.addf %176, %179 : vector<8x32xf32>
    %181 = math.tanh %180 : vector<8x32xf32>
    %cst_67 = arith.constant 1.000000e+00 : f32
    %182 = vector.broadcast %cst_67 : f32 to vector<8x32xf32>
    %183 = arith.subf %182, %175 : vector<8x32xf32>
    %184 = arith.mulf %183, %181 : vector<8x32xf32>
    %185 = arith.mulf %175, %126 : vector<8x32xf32>
    %186 = arith.addf %184, %185 : vector<8x32xf32>
    %cst_68 = arith.constant dense<0.000000e+00> : vector<8x96xf32>
    %187 = tpu.matmul %186, %21, %cst_68 {dimension_numbers = #tpu.dot_dimension_numbers<[1], [0], [0], [1], [0, 0, 1, 1], [], []>} : vector<8x32xf32>, vector<32x96xf32>, vector<8x96xf32> -> vector<8x96xf32>
    %188 = arith.addf %187, %25 : vector<8x96xf32>
    %cst_69 = arith.constant dense<0.000000e+00> : vector<8x96xf32>
    %189 = tpu.matmul %156, %19, %cst_69 {dimension_numbers = #tpu.dot_dimension_numbers<[1], [0], [0], [1], [0, 0, 1, 1], [], []>} : vector<8x32xf32>, vector<32x96xf32>, vector<8x96xf32> -> vector<8x96xf32>
    %190 = vector.extract_strided_slice %188 {offsets = [0, 0], sizes = [8, 32], strides = [1, 1]} : vector<8x96xf32> to vector<8x32xf32>
    %191 = vector.extract_strided_slice %189 {offsets = [0, 0], sizes = [8, 32], strides = [1, 1]} : vector<8x96xf32> to vector<8x32xf32>
    %192 = arith.addf %190, %191 : vector<8x32xf32>
    %193 = arith.negf %192 : vector<8x32xf32>
    %194 = math.exp %193 : vector<8x32xf32>
    %cst_70 = arith.constant 1.000000e+00 : f32
    %195 = vector.broadcast %cst_70 : f32 to vector<8x32xf32>
    %196 = arith.addf %195, %194 : vector<8x32xf32>
    %197 = arith.divf %195, %196 : vector<8x32xf32>
    %198 = vector.extract_strided_slice %188 {offsets = [0, 32], sizes = [8, 32], strides = [1, 1]} : vector<8x96xf32> to vector<8x32xf32>
    %199 = vector.extract_strided_slice %189 {offsets = [0, 32], sizes = [8, 32], strides = [1, 1]} : vector<8x96xf32> to vector<8x32xf32>
    %200 = arith.addf %198, %199 : vector<8x32xf32>
    %201 = arith.negf %200 : vector<8x32xf32>
    %202 = math.exp %201 : vector<8x32xf32>
    %cst_71 = arith.constant 1.000000e+00 : f32
    %203 = vector.broadcast %cst_71 : f32 to vector<8x32xf32>
    %204 = arith.addf %203, %202 : vector<8x32xf32>
    %205 = arith.divf %203, %204 : vector<8x32xf32>
    %206 = vector.extract_strided_slice %188 {offsets = [0, 64], sizes = [8, 32], strides = [1, 1]} : vector<8x96xf32> to vector<8x32xf32>
    %207 = vector.extract_strided_slice %189 {offsets = [0, 64], sizes = [8, 32], strides = [1, 1]} : vector<8x96xf32> to vector<8x32xf32>
    %208 = arith.addf %207, %33 : vector<8x32xf32>
    %209 = arith.mulf %197, %208 : vector<8x32xf32>
    %210 = arith.addf %206, %209 : vector<8x32xf32>
    %211 = math.tanh %210 : vector<8x32xf32>
    %cst_72 = arith.constant 1.000000e+00 : f32
    %212 = vector.broadcast %cst_72 : f32 to vector<8x32xf32>
    %213 = arith.subf %212, %205 : vector<8x32xf32>
    %214 = arith.mulf %213, %211 : vector<8x32xf32>
    %215 = arith.mulf %205, %156 : vector<8x32xf32>
    %216 = arith.addf %214, %215 : vector<8x32xf32>
    %c16_73 = arith.constant 16 : index
    %c0_74 = arith.constant 0 : index
    %217 = vector.load %arg13[%c16_73, %c0_74] : memref<64x32xf32, #tpu.memory_space<vmem>>, vector<8x32xf32>
    tpu.vector_store %arg13[%c16_73, %c0_74], %216 {strides = array<i32>} : memref<64x32xf32, #tpu.memory_space<vmem>>, vector<8x32xf32>,
    %c24 = arith.constant 24 : index
    %c0_75 = arith.constant 0 : index
    %218 = vector.load %arg12[%c24, %c0_75] : memref<64x96xf32, #tpu.memory_space<vmem>>, vector<8x96xf32>
    %cst_76 = arith.constant dense<0.000000e+00> : vector<8x96xf32>
    %219 = tpu.matmul %186, %17, %cst_76 {dimension_numbers = #tpu.dot_dimension_numbers<[1], [0], [0], [1], [0, 0, 1, 1], [], []>} : vector<8x32xf32>, vector<32x96xf32>, vector<8x96xf32> -> vector<8x96xf32>
    %220 = vector.extract_strided_slice %218 {offsets = [0, 0], sizes = [8, 32], strides = [1, 1]} : vector<8x96xf32> to vector<8x32xf32>
    %221 = vector.extract_strided_slice %219 {offsets = [0, 0], sizes = [8, 32], strides = [1, 1]} : vector<8x96xf32> to vector<8x32xf32>
    %222 = arith.addf %220, %221 : vector<8x32xf32>
    %223 = arith.negf %222 : vector<8x32xf32>
    %224 = math.exp %223 : vector<8x32xf32>
    %cst_77 = arith.constant 1.000000e+00 : f32
    %225 = vector.broadcast %cst_77 : f32 to vector<8x32xf32>
    %226 = arith.addf %225, %224 : vector<8x32xf32>
    %227 = arith.divf %225, %226 : vector<8x32xf32>
    %228 = vector.extract_strided_slice %218 {offsets = [0, 32], sizes = [8, 32], strides = [1, 1]} : vector<8x96xf32> to vector<8x32xf32>
    %229 = vector.extract_strided_slice %219 {offsets = [0, 32], sizes = [8, 32], strides = [1, 1]} : vector<8x96xf32> to vector<8x32xf32>
    %230 = arith.addf %228, %229 : vector<8x32xf32>
    %231 = arith.negf %230 : vector<8x32xf32>
    %232 = math.exp %231 : vector<8x32xf32>
    %cst_78 = arith.constant 1.000000e+00 : f32
    %233 = vector.broadcast %cst_78 : f32 to vector<8x32xf32>
    %234 = arith.addf %233, %232 : vector<8x32xf32>
    %235 = arith.divf %233, %234 : vector<8x32xf32>
    %236 = vector.extract_strided_slice %218 {offsets = [0, 64], sizes = [8, 32], strides = [1, 1]} : vector<8x96xf32> to vector<8x32xf32>
    %237 = vector.extract_strided_slice %219 {offsets = [0, 64], sizes = [8, 32], strides = [1, 1]} : vector<8x96xf32> to vector<8x32xf32>
    %238 = arith.addf %237, %29 : vector<8x32xf32>
    %239 = arith.mulf %227, %238 : vector<8x32xf32>
    %240 = arith.addf %236, %239 : vector<8x32xf32>
    %241 = math.tanh %240 : vector<8x32xf32>
    %cst_79 = arith.constant 1.000000e+00 : f32
    %242 = vector.broadcast %cst_79 : f32 to vector<8x32xf32>
    %243 = arith.subf %242, %235 : vector<8x32xf32>
    %244 = arith.mulf %243, %241 : vector<8x32xf32>
    %245 = arith.mulf %235, %186 : vector<8x32xf32>
    %246 = arith.addf %244, %245 : vector<8x32xf32>
    %cst_80 = arith.constant dense<0.000000e+00> : vector<8x96xf32>
    %247 = tpu.matmul %246, %21, %cst_80 {dimension_numbers = #tpu.dot_dimension_numbers<[1], [0], [0], [1], [0, 0, 1, 1], [], []>} : vector<8x32xf32>, vector<32x96xf32>, vector<8x96xf32> -> vector<8x96xf32>
    %248 = arith.addf %247, %25 : vector<8x96xf32>
    %cst_81 = arith.constant dense<0.000000e+00> : vector<8x96xf32>
    %249 = tpu.matmul %216, %19, %cst_81 {dimension_numbers = #tpu.dot_dimension_numbers<[1], [0], [0], [1], [0, 0, 1, 1], [], []>} : vector<8x32xf32>, vector<32x96xf32>, vector<8x96xf32> -> vector<8x96xf32>
    %250 = vector.extract_strided_slice %248 {offsets = [0, 0], sizes = [8, 32], strides = [1, 1]} : vector<8x96xf32> to vector<8x32xf32>
    %251 = vector.extract_strided_slice %249 {offsets = [0, 0], sizes = [8, 32], strides = [1, 1]} : vector<8x96xf32> to vector<8x32xf32>
    %252 = arith.addf %250, %251 : vector<8x32xf32>
    %253 = arith.negf %252 : vector<8x32xf32>
    %254 = math.exp %253 : vector<8x32xf32>
    %cst_82 = arith.constant 1.000000e+00 : f32
    %255 = vector.broadcast %cst_82 : f32 to vector<8x32xf32>
    %256 = arith.addf %255, %254 : vector<8x32xf32>
    %257 = arith.divf %255, %256 : vector<8x32xf32>
    %258 = vector.extract_strided_slice %248 {offsets = [0, 32], sizes = [8, 32], strides = [1, 1]} : vector<8x96xf32> to vector<8x32xf32>
    %259 = vector.extract_strided_slice %249 {offsets = [0, 32], sizes = [8, 32], strides = [1, 1]} : vector<8x96xf32> to vector<8x32xf32>
    %260 = arith.addf %258, %259 : vector<8x32xf32>
    %261 = arith.negf %260 : vector<8x32xf32>
    %262 = math.exp %261 : vector<8x32xf32>
    %cst_83 = arith.constant 1.000000e+00 : f32
    %263 = vector.broadcast %cst_83 : f32 to vector<8x32xf32>
    %264 = arith.addf %263, %262 : vector<8x32xf32>
    %265 = arith.divf %263, %264 : vector<8x32xf32>
    %266 = vector.extract_strided_slice %248 {offsets = [0, 64], sizes = [8, 32], strides = [1, 1]} : vector<8x96xf32> to vector<8x32xf32>
    %267 = vector.extract_strided_slice %249 {offsets = [0, 64], sizes = [8, 32], strides = [1, 1]} : vector<8x96xf32> to vector<8x32xf32>
    %268 = arith.addf %267, %33 : vector<8x32xf32>
    %269 = arith.mulf %257, %268 : vector<8x32xf32>
    %270 = arith.addf %266, %269 : vector<8x32xf32>
    %271 = math.tanh %270 : vector<8x32xf32>
    %cst_84 = arith.constant 1.000000e+00 : f32
    %272 = vector.broadcast %cst_84 : f32 to vector<8x32xf32>
    %273 = arith.subf %272, %265 : vector<8x32xf32>
    %274 = arith.mulf %273, %271 : vector<8x32xf32>
    %275 = arith.mulf %265, %216 : vector<8x32xf32>
    %276 = arith.addf %274, %275 : vector<8x32xf32>
    %c24_85 = arith.constant 24 : index
    %c0_86 = arith.constant 0 : index
    %277 = vector.load %arg13[%c24_85, %c0_86] : memref<64x32xf32, #tpu.memory_space<vmem>>, vector<8x32xf32>
    tpu.vector_store %arg13[%c24_85, %c0_86], %276 {strides = array<i32>} : memref<64x32xf32, #tpu.memory_space<vmem>>, vector<8x32xf32>,
    %c32 = arith.constant 32 : index
    %c0_87 = arith.constant 0 : index
    %278 = vector.load %arg12[%c32, %c0_87] : memref<64x96xf32, #tpu.memory_space<vmem>>, vector<8x96xf32>
    %cst_88 = arith.constant dense<0.000000e+00> : vector<8x96xf32>
    %279 = tpu.matmul %246, %17, %cst_88 {dimension_numbers = #tpu.dot_dimension_numbers<[1], [0], [0], [1], [0, 0, 1, 1], [], []>} : vector<8x32xf32>, vector<32x96xf32>, vector<8x96xf32> -> vector<8x96xf32>
    %280 = vector.extract_strided_slice %278 {offsets = [0, 0], sizes = [8, 32], strides = [1, 1]} : vector<8x96xf32> to vector<8x32xf32>
    %281 = vector.extract_strided_slice %279 {offsets = [0, 0], sizes = [8, 32], strides = [1, 1]} : vector<8x96xf32> to vector<8x32xf32>
    %282 = arith.addf %280, %281 : vector<8x32xf32>
    %283 = arith.negf %282 : vector<8x32xf32>
    %284 = math.exp %283 : vector<8x32xf32>
    %cst_89 = arith.constant 1.000000e+00 : f32
    %285 = vector.broadcast %cst_89 : f32 to vector<8x32xf32>
    %286 = arith.addf %285, %284 : vector<8x32xf32>
    %287 = arith.divf %285, %286 : vector<8x32xf32>
    %288 = vector.extract_strided_slice %278 {offsets = [0, 32], sizes = [8, 32], strides = [1, 1]} : vector<8x96xf32> to vector<8x32xf32>
    %289 = vector.extract_strided_slice %279 {offsets = [0, 32], sizes = [8, 32], strides = [1, 1]} : vector<8x96xf32> to vector<8x32xf32>
    %290 = arith.addf %288, %289 : vector<8x32xf32>
    %291 = arith.negf %290 : vector<8x32xf32>
    %292 = math.exp %291 : vector<8x32xf32>
    %cst_90 = arith.constant 1.000000e+00 : f32
    %293 = vector.broadcast %cst_90 : f32 to vector<8x32xf32>
    %294 = arith.addf %293, %292 : vector<8x32xf32>
    %295 = arith.divf %293, %294 : vector<8x32xf32>
    %296 = vector.extract_strided_slice %278 {offsets = [0, 64], sizes = [8, 32], strides = [1, 1]} : vector<8x96xf32> to vector<8x32xf32>
    %297 = vector.extract_strided_slice %279 {offsets = [0, 64], sizes = [8, 32], strides = [1, 1]} : vector<8x96xf32> to vector<8x32xf32>
    %298 = arith.addf %297, %29 : vector<8x32xf32>
    %299 = arith.mulf %287, %298 : vector<8x32xf32>
    %300 = arith.addf %296, %299 : vector<8x32xf32>
    %301 = math.tanh %300 : vector<8x32xf32>
    %cst_91 = arith.constant 1.000000e+00 : f32
    %302 = vector.broadcast %cst_91 : f32 to vector<8x32xf32>
    %303 = arith.subf %302, %295 : vector<8x32xf32>
    %304 = arith.mulf %303, %301 : vector<8x32xf32>
    %305 = arith.mulf %295, %246 : vector<8x32xf32>
    %306 = arith.addf %304, %305 : vector<8x32xf32>
    %cst_92 = arith.constant dense<0.000000e+00> : vector<8x96xf32>
    %307 = tpu.matmul %306, %21, %cst_92 {dimension_numbers = #tpu.dot_dimension_numbers<[1], [0], [0], [1], [0, 0, 1, 1], [], []>} : vector<8x32xf32>, vector<32x96xf32>, vector<8x96xf32> -> vector<8x96xf32>
    %308 = arith.addf %307, %25 : vector<8x96xf32>
    %cst_93 = arith.constant dense<0.000000e+00> : vector<8x96xf32>
    %309 = tpu.matmul %276, %19, %cst_93 {dimension_numbers = #tpu.dot_dimension_numbers<[1], [0], [0], [1], [0, 0, 1, 1], [], []>} : vector<8x32xf32>, vector<32x96xf32>, vector<8x96xf32> -> vector<8x96xf32>
    %310 = vector.extract_strided_slice %308 {offsets = [0, 0], sizes = [8, 32], strides = [1, 1]} : vector<8x96xf32> to vector<8x32xf32>
    %311 = vector.extract_strided_slice %309 {offsets = [0, 0], sizes = [8, 32], strides = [1, 1]} : vector<8x96xf32> to vector<8x32xf32>
    %312 = arith.addf %310, %311 : vector<8x32xf32>
    %313 = arith.negf %312 : vector<8x32xf32>
    %314 = math.exp %313 : vector<8x32xf32>
    %cst_94 = arith.constant 1.000000e+00 : f32
    %315 = vector.broadcast %cst_94 : f32 to vector<8x32xf32>
    %316 = arith.addf %315, %314 : vector<8x32xf32>
    %317 = arith.divf %315, %316 : vector<8x32xf32>
    %318 = vector.extract_strided_slice %308 {offsets = [0, 32], sizes = [8, 32], strides = [1, 1]} : vector<8x96xf32> to vector<8x32xf32>
    %319 = vector.extract_strided_slice %309 {offsets = [0, 32], sizes = [8, 32], strides = [1, 1]} : vector<8x96xf32> to vector<8x32xf32>
    %320 = arith.addf %318, %319 : vector<8x32xf32>
    %321 = arith.negf %320 : vector<8x32xf32>
    %322 = math.exp %321 : vector<8x32xf32>
    %cst_95 = arith.constant 1.000000e+00 : f32
    %323 = vector.broadcast %cst_95 : f32 to vector<8x32xf32>
    %324 = arith.addf %323, %322 : vector<8x32xf32>
    %325 = arith.divf %323, %324 : vector<8x32xf32>
    %326 = vector.extract_strided_slice %308 {offsets = [0, 64], sizes = [8, 32], strides = [1, 1]} : vector<8x96xf32> to vector<8x32xf32>
    %327 = vector.extract_strided_slice %309 {offsets = [0, 64], sizes = [8, 32], strides = [1, 1]} : vector<8x96xf32> to vector<8x32xf32>
    %328 = arith.addf %327, %33 : vector<8x32xf32>
    %329 = arith.mulf %317, %328 : vector<8x32xf32>
    %330 = arith.addf %326, %329 : vector<8x32xf32>
    %331 = math.tanh %330 : vector<8x32xf32>
    %cst_96 = arith.constant 1.000000e+00 : f32
    %332 = vector.broadcast %cst_96 : f32 to vector<8x32xf32>
    %333 = arith.subf %332, %325 : vector<8x32xf32>
    %334 = arith.mulf %333, %331 : vector<8x32xf32>
    %335 = arith.mulf %325, %276 : vector<8x32xf32>
    %336 = arith.addf %334, %335 : vector<8x32xf32>
    %c32_97 = arith.constant 32 : index
    %c0_98 = arith.constant 0 : index
    %337 = vector.load %arg13[%c32_97, %c0_98] : memref<64x32xf32, #tpu.memory_space<vmem>>, vector<8x32xf32>
    tpu.vector_store %arg13[%c32_97, %c0_98], %336 {strides = array<i32>} : memref<64x32xf32, #tpu.memory_space<vmem>>, vector<8x32xf32>,
    %c40 = arith.constant 40 : index
    %c0_99 = arith.constant 0 : index
    %338 = vector.load %arg12[%c40, %c0_99] : memref<64x96xf32, #tpu.memory_space<vmem>>, vector<8x96xf32>
    %cst_100 = arith.constant dense<0.000000e+00> : vector<8x96xf32>
    %339 = tpu.matmul %306, %17, %cst_100 {dimension_numbers = #tpu.dot_dimension_numbers<[1], [0], [0], [1], [0, 0, 1, 1], [], []>} : vector<8x32xf32>, vector<32x96xf32>, vector<8x96xf32> -> vector<8x96xf32>
    %340 = vector.extract_strided_slice %338 {offsets = [0, 0], sizes = [8, 32], strides = [1, 1]} : vector<8x96xf32> to vector<8x32xf32>
    %341 = vector.extract_strided_slice %339 {offsets = [0, 0], sizes = [8, 32], strides = [1, 1]} : vector<8x96xf32> to vector<8x32xf32>
    %342 = arith.addf %340, %341 : vector<8x32xf32>
    %343 = arith.negf %342 : vector<8x32xf32>
    %344 = math.exp %343 : vector<8x32xf32>
    %cst_101 = arith.constant 1.000000e+00 : f32
    %345 = vector.broadcast %cst_101 : f32 to vector<8x32xf32>
    %346 = arith.addf %345, %344 : vector<8x32xf32>
    %347 = arith.divf %345, %346 : vector<8x32xf32>
    %348 = vector.extract_strided_slice %338 {offsets = [0, 32], sizes = [8, 32], strides = [1, 1]} : vector<8x96xf32> to vector<8x32xf32>
    %349 = vector.extract_strided_slice %339 {offsets = [0, 32], sizes = [8, 32], strides = [1, 1]} : vector<8x96xf32> to vector<8x32xf32>
    %350 = arith.addf %348, %349 : vector<8x32xf32>
    %351 = arith.negf %350 : vector<8x32xf32>
    %352 = math.exp %351 : vector<8x32xf32>
    %cst_102 = arith.constant 1.000000e+00 : f32
    %353 = vector.broadcast %cst_102 : f32 to vector<8x32xf32>
    %354 = arith.addf %353, %352 : vector<8x32xf32>
    %355 = arith.divf %353, %354 : vector<8x32xf32>
    %356 = vector.extract_strided_slice %338 {offsets = [0, 64], sizes = [8, 32], strides = [1, 1]} : vector<8x96xf32> to vector<8x32xf32>
    %357 = vector.extract_strided_slice %339 {offsets = [0, 64], sizes = [8, 32], strides = [1, 1]} : vector<8x96xf32> to vector<8x32xf32>
    %358 = arith.addf %357, %29 : vector<8x32xf32>
    %359 = arith.mulf %347, %358 : vector<8x32xf32>
    %360 = arith.addf %356, %359 : vector<8x32xf32>
    %361 = math.tanh %360 : vector<8x32xf32>
    %cst_103 = arith.constant 1.000000e+00 : f32
    %362 = vector.broadcast %cst_103 : f32 to vector<8x32xf32>
    %363 = arith.subf %362, %355 : vector<8x32xf32>
    %364 = arith.mulf %363, %361 : vector<8x32xf32>
    %365 = arith.mulf %355, %306 : vector<8x32xf32>
    %366 = arith.addf %364, %365 : vector<8x32xf32>
    %cst_104 = arith.constant dense<0.000000e+00> : vector<8x96xf32>
    %367 = tpu.matmul %366, %21, %cst_104 {dimension_numbers = #tpu.dot_dimension_numbers<[1], [0], [0], [1], [0, 0, 1, 1], [], []>} : vector<8x32xf32>, vector<32x96xf32>, vector<8x96xf32> -> vector<8x96xf32>
    %368 = arith.addf %367, %25 : vector<8x96xf32>
    %cst_105 = arith.constant dense<0.000000e+00> : vector<8x96xf32>
    %369 = tpu.matmul %336, %19, %cst_105 {dimension_numbers = #tpu.dot_dimension_numbers<[1], [0], [0], [1], [0, 0, 1, 1], [], []>} : vector<8x32xf32>, vector<32x96xf32>, vector<8x96xf32> -> vector<8x96xf32>
    %370 = vector.extract_strided_slice %368 {offsets = [0, 0], sizes = [8, 32], strides = [1, 1]} : vector<8x96xf32> to vector<8x32xf32>
    %371 = vector.extract_strided_slice %369 {offsets = [0, 0], sizes = [8, 32], strides = [1, 1]} : vector<8x96xf32> to vector<8x32xf32>
    %372 = arith.addf %370, %371 : vector<8x32xf32>
    %373 = arith.negf %372 : vector<8x32xf32>
    %374 = math.exp %373 : vector<8x32xf32>
    %cst_106 = arith.constant 1.000000e+00 : f32
    %375 = vector.broadcast %cst_106 : f32 to vector<8x32xf32>
    %376 = arith.addf %375, %374 : vector<8x32xf32>
    %377 = arith.divf %375, %376 : vector<8x32xf32>
    %378 = vector.extract_strided_slice %368 {offsets = [0, 32], sizes = [8, 32], strides = [1, 1]} : vector<8x96xf32> to vector<8x32xf32>
    %379 = vector.extract_strided_slice %369 {offsets = [0, 32], sizes = [8, 32], strides = [1, 1]} : vector<8x96xf32> to vector<8x32xf32>
    %380 = arith.addf %378, %379 : vector<8x32xf32>
    %381 = arith.negf %380 : vector<8x32xf32>
    %382 = math.exp %381 : vector<8x32xf32>
    %cst_107 = arith.constant 1.000000e+00 : f32
    %383 = vector.broadcast %cst_107 : f32 to vector<8x32xf32>
    %384 = arith.addf %383, %382 : vector<8x32xf32>
    %385 = arith.divf %383, %384 : vector<8x32xf32>
    %386 = vector.extract_strided_slice %368 {offsets = [0, 64], sizes = [8, 32], strides = [1, 1]} : vector<8x96xf32> to vector<8x32xf32>
    %387 = vector.extract_strided_slice %369 {offsets = [0, 64], sizes = [8, 32], strides = [1, 1]} : vector<8x96xf32> to vector<8x32xf32>
    %388 = arith.addf %387, %33 : vector<8x32xf32>
    %389 = arith.mulf %377, %388 : vector<8x32xf32>
    %390 = arith.addf %386, %389 : vector<8x32xf32>
    %391 = math.tanh %390 : vector<8x32xf32>
    %cst_108 = arith.constant 1.000000e+00 : f32
    %392 = vector.broadcast %cst_108 : f32 to vector<8x32xf32>
    %393 = arith.subf %392, %385 : vector<8x32xf32>
    %394 = arith.mulf %393, %391 : vector<8x32xf32>
    %395 = arith.mulf %385, %336 : vector<8x32xf32>
    %396 = arith.addf %394, %395 : vector<8x32xf32>
    %c40_109 = arith.constant 40 : index
    %c0_110 = arith.constant 0 : index
    %397 = vector.load %arg13[%c40_109, %c0_110] : memref<64x32xf32, #tpu.memory_space<vmem>>, vector<8x32xf32>
    tpu.vector_store %arg13[%c40_109, %c0_110], %396 {strides = array<i32>} : memref<64x32xf32, #tpu.memory_space<vmem>>, vector<8x32xf32>,
    %c48 = arith.constant 48 : index
    %c0_111 = arith.constant 0 : index
    %398 = vector.load %arg12[%c48, %c0_111] : memref<64x96xf32, #tpu.memory_space<vmem>>, vector<8x96xf32>
    %cst_112 = arith.constant dense<0.000000e+00> : vector<8x96xf32>
    %399 = tpu.matmul %366, %17, %cst_112 {dimension_numbers = #tpu.dot_dimension_numbers<[1], [0], [0], [1], [0, 0, 1, 1], [], []>} : vector<8x32xf32>, vector<32x96xf32>, vector<8x96xf32> -> vector<8x96xf32>
    %400 = vector.extract_strided_slice %398 {offsets = [0, 0], sizes = [8, 32], strides = [1, 1]} : vector<8x96xf32> to vector<8x32xf32>
    %401 = vector.extract_strided_slice %399 {offsets = [0, 0], sizes = [8, 32], strides = [1, 1]} : vector<8x96xf32> to vector<8x32xf32>
    %402 = arith.addf %400, %401 : vector<8x32xf32>
    %403 = arith.negf %402 : vector<8x32xf32>
    %404 = math.exp %403 : vector<8x32xf32>
    %cst_113 = arith.constant 1.000000e+00 : f32
    %405 = vector.broadcast %cst_113 : f32 to vector<8x32xf32>
    %406 = arith.addf %405, %404 : vector<8x32xf32>
    %407 = arith.divf %405, %406 : vector<8x32xf32>
    %408 = vector.extract_strided_slice %398 {offsets = [0, 32], sizes = [8, 32], strides = [1, 1]} : vector<8x96xf32> to vector<8x32xf32>
    %409 = vector.extract_strided_slice %399 {offsets = [0, 32], sizes = [8, 32], strides = [1, 1]} : vector<8x96xf32> to vector<8x32xf32>
    %410 = arith.addf %408, %409 : vector<8x32xf32>
    %411 = arith.negf %410 : vector<8x32xf32>
    %412 = math.exp %411 : vector<8x32xf32>
    %cst_114 = arith.constant 1.000000e+00 : f32
    %413 = vector.broadcast %cst_114 : f32 to vector<8x32xf32>
    %414 = arith.addf %413, %412 : vector<8x32xf32>
    %415 = arith.divf %413, %414 : vector<8x32xf32>
    %416 = vector.extract_strided_slice %398 {offsets = [0, 64], sizes = [8, 32], strides = [1, 1]} : vector<8x96xf32> to vector<8x32xf32>
    %417 = vector.extract_strided_slice %399 {offsets = [0, 64], sizes = [8, 32], strides = [1, 1]} : vector<8x96xf32> to vector<8x32xf32>
    %418 = arith.addf %417, %29 : vector<8x32xf32>
    %419 = arith.mulf %407, %418 : vector<8x32xf32>
    %420 = arith.addf %416, %419 : vector<8x32xf32>
    %421 = math.tanh %420 : vector<8x32xf32>
    %cst_115 = arith.constant 1.000000e+00 : f32
    %422 = vector.broadcast %cst_115 : f32 to vector<8x32xf32>
    %423 = arith.subf %422, %415 : vector<8x32xf32>
    %424 = arith.mulf %423, %421 : vector<8x32xf32>
    %425 = arith.mulf %415, %366 : vector<8x32xf32>
    %426 = arith.addf %424, %425 : vector<8x32xf32>
    %cst_116 = arith.constant dense<0.000000e+00> : vector<8x96xf32>
    %427 = tpu.matmul %426, %21, %cst_116 {dimension_numbers = #tpu.dot_dimension_numbers<[1], [0], [0], [1], [0, 0, 1, 1], [], []>} : vector<8x32xf32>, vector<32x96xf32>, vector<8x96xf32> -> vector<8x96xf32>
    %428 = arith.addf %427, %25 : vector<8x96xf32>
    %cst_117 = arith.constant dense<0.000000e+00> : vector<8x96xf32>
    %429 = tpu.matmul %396, %19, %cst_117 {dimension_numbers = #tpu.dot_dimension_numbers<[1], [0], [0], [1], [0, 0, 1, 1], [], []>} : vector<8x32xf32>, vector<32x96xf32>, vector<8x96xf32> -> vector<8x96xf32>
    %430 = vector.extract_strided_slice %428 {offsets = [0, 0], sizes = [8, 32], strides = [1, 1]} : vector<8x96xf32> to vector<8x32xf32>
    %431 = vector.extract_strided_slice %429 {offsets = [0, 0], sizes = [8, 32], strides = [1, 1]} : vector<8x96xf32> to vector<8x32xf32>
    %432 = arith.addf %430, %431 : vector<8x32xf32>
    %433 = arith.negf %432 : vector<8x32xf32>
    %434 = math.exp %433 : vector<8x32xf32>
    %cst_118 = arith.constant 1.000000e+00 : f32
    %435 = vector.broadcast %cst_118 : f32 to vector<8x32xf32>
    %436 = arith.addf %435, %434 : vector<8x32xf32>
    %437 = arith.divf %435, %436 : vector<8x32xf32>
    %438 = vector.extract_strided_slice %428 {offsets = [0, 32], sizes = [8, 32], strides = [1, 1]} : vector<8x96xf32> to vector<8x32xf32>
    %439 = vector.extract_strided_slice %429 {offsets = [0, 32], sizes = [8, 32], strides = [1, 1]} : vector<8x96xf32> to vector<8x32xf32>
    %440 = arith.addf %438, %439 : vector<8x32xf32>
    %441 = arith.negf %440 : vector<8x32xf32>
    %442 = math.exp %441 : vector<8x32xf32>
    %cst_119 = arith.constant 1.000000e+00 : f32
    %443 = vector.broadcast %cst_119 : f32 to vector<8x32xf32>
    %444 = arith.addf %443, %442 : vector<8x32xf32>
    %445 = arith.divf %443, %444 : vector<8x32xf32>
    %446 = vector.extract_strided_slice %428 {offsets = [0, 64], sizes = [8, 32], strides = [1, 1]} : vector<8x96xf32> to vector<8x32xf32>
    %447 = vector.extract_strided_slice %429 {offsets = [0, 64], sizes = [8, 32], strides = [1, 1]} : vector<8x96xf32> to vector<8x32xf32>
    %448 = arith.addf %447, %33 : vector<8x32xf32>
    %449 = arith.mulf %437, %448 : vector<8x32xf32>
    %450 = arith.addf %446, %449 : vector<8x32xf32>
    %451 = math.tanh %450 : vector<8x32xf32>
    %cst_120 = arith.constant 1.000000e+00 : f32
    %452 = vector.broadcast %cst_120 : f32 to vector<8x32xf32>
    %453 = arith.subf %452, %445 : vector<8x32xf32>
    %454 = arith.mulf %453, %451 : vector<8x32xf32>
    %455 = arith.mulf %445, %396 : vector<8x32xf32>
    %456 = arith.addf %454, %455 : vector<8x32xf32>
    %c48_121 = arith.constant 48 : index
    %c0_122 = arith.constant 0 : index
    %457 = vector.load %arg13[%c48_121, %c0_122] : memref<64x32xf32, #tpu.memory_space<vmem>>, vector<8x32xf32>
    tpu.vector_store %arg13[%c48_121, %c0_122], %456 {strides = array<i32>} : memref<64x32xf32, #tpu.memory_space<vmem>>, vector<8x32xf32>,
    %c56 = arith.constant 56 : index
    %c0_123 = arith.constant 0 : index
    %458 = vector.load %arg12[%c56, %c0_123] : memref<64x96xf32, #tpu.memory_space<vmem>>, vector<8x96xf32>
    %cst_124 = arith.constant dense<0.000000e+00> : vector<8x96xf32>
    %459 = tpu.matmul %426, %17, %cst_124 {dimension_numbers = #tpu.dot_dimension_numbers<[1], [0], [0], [1], [0, 0, 1, 1], [], []>} : vector<8x32xf32>, vector<32x96xf32>, vector<8x96xf32> -> vector<8x96xf32>
    %460 = vector.extract_strided_slice %458 {offsets = [0, 0], sizes = [8, 32], strides = [1, 1]} : vector<8x96xf32> to vector<8x32xf32>
    %461 = vector.extract_strided_slice %459 {offsets = [0, 0], sizes = [8, 32], strides = [1, 1]} : vector<8x96xf32> to vector<8x32xf32>
    %462 = arith.addf %460, %461 : vector<8x32xf32>
    %463 = arith.negf %462 : vector<8x32xf32>
    %464 = math.exp %463 : vector<8x32xf32>
    %cst_125 = arith.constant 1.000000e+00 : f32
    %465 = vector.broadcast %cst_125 : f32 to vector<8x32xf32>
    %466 = arith.addf %465, %464 : vector<8x32xf32>
    %467 = arith.divf %465, %466 : vector<8x32xf32>
    %468 = vector.extract_strided_slice %458 {offsets = [0, 32], sizes = [8, 32], strides = [1, 1]} : vector<8x96xf32> to vector<8x32xf32>
    %469 = vector.extract_strided_slice %459 {offsets = [0, 32], sizes = [8, 32], strides = [1, 1]} : vector<8x96xf32> to vector<8x32xf32>
    %470 = arith.addf %468, %469 : vector<8x32xf32>
    %471 = arith.negf %470 : vector<8x32xf32>
    %472 = math.exp %471 : vector<8x32xf32>
    %cst_126 = arith.constant 1.000000e+00 : f32
    %473 = vector.broadcast %cst_126 : f32 to vector<8x32xf32>
    %474 = arith.addf %473, %472 : vector<8x32xf32>
    %475 = arith.divf %473, %474 : vector<8x32xf32>
    %476 = vector.extract_strided_slice %458 {offsets = [0, 64], sizes = [8, 32], strides = [1, 1]} : vector<8x96xf32> to vector<8x32xf32>
    %477 = vector.extract_strided_slice %459 {offsets = [0, 64], sizes = [8, 32], strides = [1, 1]} : vector<8x96xf32> to vector<8x32xf32>
    %478 = arith.addf %477, %29 : vector<8x32xf32>
    %479 = arith.mulf %467, %478 : vector<8x32xf32>
    %480 = arith.addf %476, %479 : vector<8x32xf32>
    %481 = math.tanh %480 : vector<8x32xf32>
    %cst_127 = arith.constant 1.000000e+00 : f32
    %482 = vector.broadcast %cst_127 : f32 to vector<8x32xf32>
    %483 = arith.subf %482, %475 : vector<8x32xf32>
    %484 = arith.mulf %483, %481 : vector<8x32xf32>
    %485 = arith.mulf %475, %426 : vector<8x32xf32>
    %486 = arith.addf %484, %485 : vector<8x32xf32>
    %cst_128 = arith.constant dense<0.000000e+00> : vector<8x96xf32>
    %487 = tpu.matmul %486, %21, %cst_128 {dimension_numbers = #tpu.dot_dimension_numbers<[1], [0], [0], [1], [0, 0, 1, 1], [], []>} : vector<8x32xf32>, vector<32x96xf32>, vector<8x96xf32> -> vector<8x96xf32>
    %488 = arith.addf %487, %25 : vector<8x96xf32>
    %cst_129 = arith.constant dense<0.000000e+00> : vector<8x96xf32>
    %489 = tpu.matmul %456, %19, %cst_129 {dimension_numbers = #tpu.dot_dimension_numbers<[1], [0], [0], [1], [0, 0, 1, 1], [], []>} : vector<8x32xf32>, vector<32x96xf32>, vector<8x96xf32> -> vector<8x96xf32>
    %490 = vector.extract_strided_slice %488 {offsets = [0, 0], sizes = [8, 32], strides = [1, 1]} : vector<8x96xf32> to vector<8x32xf32>
    %491 = vector.extract_strided_slice %489 {offsets = [0, 0], sizes = [8, 32], strides = [1, 1]} : vector<8x96xf32> to vector<8x32xf32>
    %492 = arith.addf %490, %491 : vector<8x32xf32>
    %493 = arith.negf %492 : vector<8x32xf32>
    %494 = math.exp %493 : vector<8x32xf32>
    %cst_130 = arith.constant 1.000000e+00 : f32
    %495 = vector.broadcast %cst_130 : f32 to vector<8x32xf32>
    %496 = arith.addf %495, %494 : vector<8x32xf32>
    %497 = arith.divf %495, %496 : vector<8x32xf32>
    %498 = vector.extract_strided_slice %488 {offsets = [0, 32], sizes = [8, 32], strides = [1, 1]} : vector<8x96xf32> to vector<8x32xf32>
    %499 = vector.extract_strided_slice %489 {offsets = [0, 32], sizes = [8, 32], strides = [1, 1]} : vector<8x96xf32> to vector<8x32xf32>
    %500 = arith.addf %498, %499 : vector<8x32xf32>
    %501 = arith.negf %500 : vector<8x32xf32>
    %502 = math.exp %501 : vector<8x32xf32>
    %cst_131 = arith.constant 1.000000e+00 : f32
    %503 = vector.broadcast %cst_131 : f32 to vector<8x32xf32>
    %504 = arith.addf %503, %502 : vector<8x32xf32>
    %505 = arith.divf %503, %504 : vector<8x32xf32>
    %506 = vector.extract_strided_slice %488 {offsets = [0, 64], sizes = [8, 32], strides = [1, 1]} : vector<8x96xf32> to vector<8x32xf32>
    %507 = vector.extract_strided_slice %489 {offsets = [0, 64], sizes = [8, 32], strides = [1, 1]} : vector<8x96xf32> to vector<8x32xf32>
    %508 = arith.addf %507, %33 : vector<8x32xf32>
    %509 = arith.mulf %497, %508 : vector<8x32xf32>
    %510 = arith.addf %506, %509 : vector<8x32xf32>
    %511 = math.tanh %510 : vector<8x32xf32>
    %cst_132 = arith.constant 1.000000e+00 : f32
    %512 = vector.broadcast %cst_132 : f32 to vector<8x32xf32>
    %513 = arith.subf %512, %505 : vector<8x32xf32>
    %514 = arith.mulf %513, %511 : vector<8x32xf32>
    %515 = arith.mulf %505, %456 : vector<8x32xf32>
    %516 = arith.addf %514, %515 : vector<8x32xf32>
    %c56_133 = arith.constant 56 : index
    %c0_134 = arith.constant 0 : index
    %517 = vector.load %arg13[%c56_133, %c0_134] : memref<64x32xf32, #tpu.memory_space<vmem>>, vector<8x32xf32>
    tpu.vector_store %arg13[%c56_133, %c0_134], %516 {strides = array<i32>} : memref<64x32xf32, #tpu.memory_space<vmem>>, vector<8x32xf32>,
    %c0_135 = arith.constant 0 : index
    %c0_136 = arith.constant 0 : index
    %c0_137 = arith.constant 0 : index
    %518 = vector.load %arg11[%c0_135, %c0_136, %c0_137] : memref<2x8x32xf32, #tpu.memory_space<vmem>>, vector<1x8x32xf32>
    %519 = vector.shape_cast %518 : vector<1x8x32xf32> to vector<8x32xf32>
    %520 = vector.shape_cast %486 : vector<8x32xf32> to vector<1x8x32xf32>
    tpu.vector_store %arg11[%c0_135, %c0_136, %c0_137], %520 {strides = array<i32>} : memref<2x8x32xf32, #tpu.memory_space<vmem>>, vector<1x8x32xf32>,
    %c1_138 = arith.constant 1 : index
    %c0_139 = arith.constant 0 : index
    %c0_140 = arith.constant 0 : index
    %521 = vector.load %arg11[%c1_138, %c0_139, %c0_140] : memref<2x8x32xf32, #tpu.memory_space<vmem>>, vector<1x8x32xf32>
    %522 = vector.shape_cast %521 : vector<1x8x32xf32> to vector<8x32xf32>
    %523 = vector.shape_cast %516 : vector<8x32xf32> to vector<1x8x32xf32>
    tpu.vector_store %arg11[%c1_138, %c0_139, %c0_140], %523 {strides = array<i32>} : memref<2x8x32xf32, #tpu.memory_space<vmem>>, vector<1x8x32xf32>,
    %c0_141 = arith.constant 0 : index
    %c0_142 = arith.constant 0 : index
    %524 = vector.load %arg13[%c0_141, %c0_142] : memref<64x32xf32, #tpu.memory_space<vmem>>, vector<64x32xf32>
    %c0_143 = arith.constant 0 : index
    %c0_144 = arith.constant 0 : index
    %525 = vector.load %arg7[%c0_143, %c0_144] : memref<32x128xf32, #tpu.memory_space<vmem>>, vector<32x128xf32>
    %cst_145 = arith.constant dense<0.000000e+00> : vector<64x128xf32>
    %526 = tpu.matmul %524, %525, %cst_145 {dimension_numbers = #tpu.dot_dimension_numbers<[1], [0], [0], [1], [0, 0, 1, 1], [], []>} : vector<64x32xf32>, vector<32x128xf32>, vector<64x128xf32> -> vector<64x128xf32>
    %c0_146 = arith.constant 0 : index
    %c0_147 = arith.constant 0 : index
    %527 = vector.load %arg8[%c0_146, %c0_147] : memref<1x128xf32, #tpu.memory_space<vmem>>, vector<1x128xf32>
    %528 = vector.broadcast %527 : vector<1x128xf32> to vector<64x128xf32>
    %529 = arith.addf %526, %528 : vector<64x128xf32>
    %c0_148 = arith.constant 0 : index
    %c0_149 = arith.constant 0 : index
    %530 = vector.load %arg10[%c0_148, %c0_149] : memref<64x128xf32, #tpu.memory_space<vmem>>, vector<64x128xf32>
    tpu.vector_store %arg10[%c0_148, %c0_149], %529 {strides = array<i32>} : memref<64x128xf32, #tpu.memory_space<vmem>>, vector<64x128xf32>,
    return
  }
}

</mosaic_0001>

<llo_original>
// kernel: tpu_custom_call.1
$region0: #{tpu_custom_call.1}
  #allocation0 [shape = 'u32[]', space=smem, size = 0x4, offset = 0x4, fixed_abs, tag = 'smem constant byte address 0x4 - core index']
  #allocation1 [shape = 'u32[72,128]{1,0:T(1,128)}', space=vmem, size = 0x9000, scoped, tag = 'internal scratch']
  #allocation2 [shape = 'f32[64,96]{1,0:T(8,128)}', space=vmem, size = 0x8000, scoped, tag = 'scratch operand']
  #allocation3 [shape = 'f32[64,32]{1,0:T(8,128)}', space=vmem, size = 0x8000, scoped, tag = 'scratch operand']
  %s0 = inlined_call_operand.vmem [shape: f32[64,12], index: 0, kind: input, shape index: {}]
  %s1 = inlined_call_operand.vmem [shape: f32[12,32], index: 1, kind: input, shape index: {}]
  %s2 = inlined_call_operand.hbm [shape: f32[1,32], index: 2, kind: input, shape index: {}]
  %s3 = inlined_call_operand.vmem [shape: f32[2,32,96], index: 3, kind: input, shape index: {}]
  %s4 = inlined_call_operand.hbm [shape: f32[2,32,96], index: 4, kind: input, shape index: {}]
  %s5 = inlined_call_operand.vmem [shape: f32[2,1,96], index: 5, kind: input, shape index: {}]
  %s6 = inlined_call_operand.vmem [shape: f32[2,1,32], index: 6, kind: input, shape index: {}]
  %s7 = inlined_call_operand.hbm [shape: f32[32,128], index: 7, kind: input, shape index: {}]
  %s8 = inlined_call_operand.vmem [shape: f32[1,128], index: 8, kind: input, shape index: {}]
  %s9 = inlined_call_operand.hbm [shape: f32[2,8,32], index: 9, kind: input, shape index: {}]
  %s10 = inlined_call_operand.hbm [shape: f32[64,128], index: 10, kind: output, shape index: {0}]
  %s11 = inlined_call_operand.hbm [shape: f32[2,8,32], index: 11, kind: output, shape index: {1}]
  %12 = xla_tuple %s10, %s11
  %s13 = sld [smem:[#allocation0]]
  $region74: #{tpu_custom_call.1} parent=0
    _
  %s15 = ssub.s32 1, %s13
  %s16 = scalar_select 0, %s15, %s13
  $region1: #{tpu_custom_call.1} parent=0
    #allocation4 [shape = 'u8[512]{0}', space=vmem, size = 0x400, scoped, tag = 'input window, operand 2, single buffered']
    #allocation5 [shape = 's32[1]{0}', space=sflag, size = 0x4, scoped, tag = 'scoped memory for tpu_custom_call.1']
    #allocation6 [shape = 's32[1]{0}', space=sflag, size = 0x4, scoped, tag = 'scoped memory for tpu_custom_call.1']
    #allocation7 [shape = 'u8[32768]{0}', space=vmem, size = 0x8000, scoped, tag = 'input window, operand 4, single buffered']
    #allocation8 [shape = 's32[1]{0}', space=sflag, size = 0x4, scoped, tag = 'scoped memory for tpu_custom_call.1']
    #allocation9 [shape = 'u8[16384]{0}', space=vmem, size = 0x4000, scoped, tag = 'input window, operand 7, single buffered']
    #allocation10 [shape = 'u8[8192]{0}', space=vmem, size = 0x2000, scoped, tag = 'input window, operand 9, single buffered']
    #allocation11 [shape = 's32[1]{0}', space=sflag, size = 0x4, scoped, tag = 'scoped memory for tpu_custom_call.1']
    #allocation12 [shape = 'u8[32768]{0}', space=vmem, size = 0x8000, scoped, tag = 'output window, operand 0, single buffered']
    #allocation13 [shape = 'u8[8192]{0}', space=vmem, size = 0x2000, scoped, tag = 'output window, operand 1, single buffered']
    #allocation14 [shape = 's32[1]{0}', space=sflag, size = 0x4, scoped, tag = 'scoped memory for tpu_custom_call.1']
    %17 = vsyncpa [#allocation5], 0
    %18 = vsyncpa [#allocation8], 0
    %19 = vsyncpa [#allocation11], 0
    %20 = vsyncpa [#allocation6], 0
    %21 = vsyncpa [#allocation14], 0
    // Predicated region
    $region2: #{tpu_custom_call.1} parent=1 // pred_check
      _
    $region3: #{tpu_custom_call.1} parent=1 // pred_check_branch
      %23 = sbr.rel (0) target = $region5
    $region4: #{tpu_custom_call.1} parent=1 // pred_region
      _
    $region5: #{tpu_custom_call.1} parent=1 // pred_fallthru
      _
    // Predicated region
    $region6: #{tpu_custom_call.1} parent=1 // pred_check
      _
    $region7: #{tpu_custom_call.1} parent=1 // pred_check_branch
      %25 = sbr.rel (0) target = $region9
    $region8: #{tpu_custom_call.1} parent=1 // pred_region
      _
    $region9: #{tpu_custom_call.1} parent=1 // pred_fallthru
      _
    // Predicated region
    $region10: #{tpu_custom_call.1} parent=1 // pred_check
      _
    $region11: #{tpu_custom_call.1} parent=1 // pred_check_branch
      %27 = sbr.rel (0) target = $region13
    $region12: #{tpu_custom_call.1} parent=1 // pred_region
      %29 = vsyncadd [#allocation5], 0
      %s31 = sshll.u32 %s2, 4
      %s32 = int_to_ptr.hbm [resolvable:$true] %s31
      %s33 = sshll.u32 [#allocation4], 4
      %s34 = int_to_ptr.vmem [resolvable:$true] %s33
      %36 = dma.hbm_to_vmem [thread:$0]  %s32, 16, %s34, [#allocation5]
    $region13: #{tpu_custom_call.1} parent=1 // pred_fallthru
      _
    // Predicated region
    $region14: #{tpu_custom_call.1} parent=1 // pred_check
      _
    $region15: #{tpu_custom_call.1} parent=1 // pred_check_branch
      %38 = sbr.rel (0) target = $region17
    $region16: #{tpu_custom_call.1} parent=1 // pred_region
      _
    $region17: #{tpu_custom_call.1} parent=1 // pred_fallthru
      _
    // Predicated region
    $region18: #{tpu_custom_call.1} parent=1 // pred_check
      _
    $region19: #{tpu_custom_call.1} parent=1 // pred_check_branch
      %40 = sbr.rel (0) target = $region21
    $region20: #{tpu_custom_call.1} parent=1 // pred_region
      %42 = vsyncadd [#allocation8], 0
      %s43 = sshll.u32 %s4, 4
      %s44 = int_to_ptr.hbm [resolvable:$true] %s43
      %s45 = sshll.u32 [#allocation7], 4
      %s46 = int_to_ptr.vmem [resolvable:$true] %s45
      %51 = dma.hbm_to_vmem [thread:$0]  %s44, 1024, %s46, [#allocation8], 128, 128, 8
    $region21: #{tpu_custom_call.1} parent=1 // pred_fallthru
      _
    // Predicated region
    $region22: #{tpu_custom_call.1} parent=1 // pred_check
      _
    $region23: #{tpu_custom_call.1} parent=1 // pred_check_branch
      %53 = sbr.rel (0) target = $region25
    $region24: #{tpu_custom_call.1} parent=1 // pred_region
      _
    $region25: #{tpu_custom_call.1} parent=1 // pred_fallthru
      _
    // Predicated region
    $region26: #{tpu_custom_call.1} parent=1 // pred_check
      _
    $region27: #{tpu_custom_call.1} parent=1 // pred_check_branch
      %55 = sbr.rel (0) target = $region29
    $region28: #{tpu_custom_call.1} parent=1 // pred_region
      _
    $region29: #{tpu_custom_call.1} parent=1 // pred_fallthru
      _
    // Predicated region
    $region30: #{tpu_custom_call.1} parent=1 // pred_check
      _
    $region31: #{tpu_custom_call.1} parent=1 // pred_check_branch
      %57 = sbr.rel (0) target = $region33
    $region32: #{tpu_custom_call.1} parent=1 // pred_region
      %59 = vsyncadd [#allocation8], 0
      %s60 = sshll.u32 %s7, 4
      %s61 = int_to_ptr.hbm [resolvable:$true] %s60
      %s62 = sshll.u32 [#allocation9], 4
      %s63 = int_to_ptr.vmem [resolvable:$true] %s62
      %68 = dma.hbm_to_vmem [thread:$0]  %s61, 512, %s63, [#allocation8], 128, 128, 8
    $region33: #{tpu_custom_call.1} parent=1 // pred_fallthru
      _
    // Predicated region
    $region34: #{tpu_custom_call.1} parent=1 // pred_check
      _
    $region35: #{tpu_custom_call.1} parent=1 // pred_check_branch
      %70 = sbr.rel (0) target = $region37
    $region36: #{tpu_custom_call.1} parent=1 // pred_region
      _
    $region37: #{tpu_custom_call.1} parent=1 // pred_fallthru
      _
    // Predicated region
    $region38: #{tpu_custom_call.1} parent=1 // pred_check
      _
    $region39: #{tpu_custom_call.1} parent=1 // pred_check_branch
      %72 = sbr.rel (0) target = $region41
    $region40: #{tpu_custom_call.1} parent=1 // pred_region
      %74 = vsyncadd [#allocation11], 0
      %s75 = sshll.u32 %s9, 4
      %s76 = int_to_ptr.hbm [resolvable:$true] %s75
      %s77 = sshll.u32 [#allocation10], 4
      %s78 = int_to_ptr.vmem [resolvable:$true] %s77
      %83 = dma.hbm_to_vmem [thread:$0]  %s76, 256, %s78, [#allocation11], 128, 128, 8
    $region41: #{tpu_custom_call.1} parent=1 // pred_fallthru
      _
    // Predicated region
    $region42: #{tpu_custom_call.1} parent=1 // pred_check
      _
    $region43: #{tpu_custom_call.1} parent=1 // pred_check_branch
      %85 = sbr.rel (0) target = $region45
    $region44: #{tpu_custom_call.1} parent=1 // pred_region
      %87 = dma.done [#allocation5], 16
    $region45: #{tpu_custom_call.1} parent=1 // pred_fallthru
      _
    // Predicated region
    $region46: #{tpu_custom_call.1} parent=1 // pred_check
      _
    $region47: #{tpu_custom_call.1} parent=1 // pred_check_branch
      %89 = sbr.rel (0) target = $region49
    $region48: #{tpu_custom_call.1} parent=1 // pred_region
      %91 = dma.done [#allocation8], 1024
    $region49: #{tpu_custom_call.1} parent=1 // pred_fallthru
      _
    // Predicated region
    $region50: #{tpu_custom_call.1} parent=1 // pred_check
      _
    $region51: #{tpu_custom_call.1} parent=1 // pred_check_branch
      %93 = sbr.rel (0) target = $region53
    $region52: #{tpu_custom_call.1} parent=1 // pred_region
      %95 = dma.done [#allocation8], 512
    $region53: #{tpu_custom_call.1} parent=1 // pred_fallthru
      _
    // Predicated region
    $region54: #{tpu_custom_call.1} parent=1 // pred_check
      _
    $region55: #{tpu_custom_call.1} parent=1 // pred_check_branch
      %97 = sbr.rel (0) target = $region57
    $region56: #{tpu_custom_call.1} parent=1 // pred_region
      %99 = dma.done [#allocation11], 256
    $region57: #{tpu_custom_call.1} parent=1 // pred_fallthru
      _
    %v100 = vld [vmem:[%s0] sm:$0xff]
    %v101 = vld [vmem:[%s0 + $0x8] sm:$0xff]
    %v102 = vld [vmem:[%s0 + $0x10] sm:$0xff]
    %v103 = vld [vmem:[%s0 + $0x18] sm:$0xff]
    %v104 = vld [vmem:[%s0 + $0x20] sm:$0xff]
    %v105 = vld [vmem:[%s0 + $0x28] sm:$0xff]
    %v106 = vld [vmem:[%s0 + $0x30] sm:$0xff]
    %v107 = vld [vmem:[%s0 + $0x38] sm:$0xff]
    %v108 = vld [vmem:[%s1] sm:$0xff]
    %v109 = vld [vmem:[%s1 + $0x8] sm:$0xf]
    %v110 = vld [vmem:[#allocation4] sm:$0x1]
    %v112 = vperm.slane %v110, 0
    %vm114 = vcmask 97280
    %v116 = vsel %vm114, %v100, 0
    %v119 = vsel %vm114, %v101, 0
    %v122 = vsel %vm114, %v102, 0
    %v125 = vsel %vm114, %v103, 0
    %v128 = vsel %vm114, %v104, 0
    %v131 = vsel %vm114, %v105, 0
    %v134 = vsel %vm114, %v106, 0
    %v137 = vsel %vm114, %v107, 0
    %vm139 = vcmask 1043456
    %v141 = vsel %vm139, %v109, 0
    %143 = vmatpush.msra.mxu0 0.0
    %144 = vmatpush.msra.mxu0 0.0
    %145 = vmatpush.msra.mxu0 0.0
    %146 = vmatpush.msra.mxu0 0.0
    %147 = vmatpush.msra.mxu0 0.0
    %148 = vmatpush.msra.mxu0 0.0
    %149 = vmatpush.msra.mxu0 0.0
    %150 = vmatpush.msra.mxu0 0.0
    %151 = vmatpush.msra.mxu0 0.0
    %152 = vmatpush.msra.mxu0 0.0
    %153 = vmatpush.msra.mxu0 0.0
    %154 = vmatpush.msra.mxu0 0.0
    %155 = vmatpush.msra.mxu0 0.0
    %156 = vmatpush.msra.mxu0 0.0
    %157 = vmatpush.msra.mxu0 %v141
    %158 = vmatpush.msra.mxu0 %v108
    %159 = vmatmul.f32.gmra.mxu0 %v116
    %v160 = vpop.f32.mrf.mxu0
    %v161 = vadd.f32 %v112, %v160
    %162 = vmatmul.f32.gmra.mxu0 %v119
    %v163 = vpop.f32.mrf.mxu0
    %v164 = vadd.f32 %v112, %v163
    %165 = vmatmul.f32.gmra.mxu0 %v122
    %v166 = vpop.f32.mrf.mxu0
    %v167 = vadd.f32 %v112, %v166
    %168 = vmatmul.f32.gmra.mxu0 %v125
    %v169 = vpop.f32.mrf.mxu0
    %v170 = vadd.f32 %v112, %v169
    %171 = vmatmul.f32.gmra.mxu0 %v128
    %v172 = vpop.f32.mrf.mxu0
    %v173 = vadd.f32 %v112, %v172
    %174 = vmatmul.f32.gmra.mxu0 %v131
    %v175 = vpop.f32.mrf.mxu0
    %v176 = vadd.f32 %v112, %v175
    %177 = vmatmul.f32.gmra.mxu0 %v134
    %v178 = vpop.f32.mrf.mxu0
    %v179 = vadd.f32 %v112, %v178
    %180 = vmatmul.f32.gmra.mxu0 %v137
    %v181 = vpop.f32.mrf.mxu0
    %v182 = vadd.f32 %v112, %v181
    %183 = vdwg.mxu0
    %v184 = vmax.f32 %v161, 0.0
    %v185 = vmax.f32 %v164, 0.0
    %v186 = vmax.f32 %v167, 0.0
    %v187 = vmax.f32 %v170, 0.0
    %v188 = vmax.f32 %v173, 0.0
    %v189 = vmax.f32 %v176, 0.0
    %v190 = vmax.f32 %v179, 0.0
    %v191 = vmax.f32 %v182, 0.0
    %v192 = vld [vmem:[%s3] sm:$0xff]
    %v193 = vld [vmem:[%s3 + $0x8] sm:$0xff]
    %v194 = vld [vmem:[%s3 + $0x10] sm:$0xff]
    %v195 = vld [vmem:[%s3 + $0x18] sm:$0xff]
    %v196 = vld [vmem:[%s5] sm:$0x1]
    %v198 = vperm.slane %v196, 0
    %vm200 = vcmask 261120
    %v202 = vsel %vm200, %v184, 0
    %v205 = vsel %vm200, %v185, 0
    %v208 = vsel %vm200, %v186, 0
    %v211 = vsel %vm200, %v187, 0
    %v214 = vsel %vm200, %v188, 0
    %v217 = vsel %vm200, %v189, 0
    %v220 = vsel %vm200, %v190, 0
    %v223 = vsel %vm200, %v191, 0
    %225 = vmatpush.msra.mxu0 0.0
    %226 = vmatpush.msra.mxu0 0.0
    %227 = vmatpush.msra.mxu0 0.0
    %228 = vmatpush.msra.mxu0 0.0
    %229 = vmatpush.msra.mxu0 0.0
    %230 = vmatpush.msra.mxu0 0.0
    %231 = vmatpush.msra.mxu0 0.0
    %232 = vmatpush.msra.mxu0 0.0
    %233 = vmatpush.msra.mxu0 0.0
    %234 = vmatpush.msra.mxu0 0.0
    %235 = vmatpush.msra.mxu0 0.0
    %236 = vmatpush.msra.mxu0 0.0
    %237 = vmatpush.msra.mxu0 %v195
    %238 = vmatpush.msra.mxu0 %v194
    %239 = vmatpush.msra.mxu0 %v193
    %240 = vmatpush.msra.mxu0 %v192
    %241 = vmatmul.f32.gmra.mxu0 %v202
    %v242 = vpop.f32.mrf.mxu0
    %v243 = vadd.f32 %v198, %v242
    %244 = vmatmul.f32.gmra.mxu0 %v205
    %v245 = vpop.f32.mrf.mxu0
    %v246 = vadd.f32 %v198, %v245
    %247 = vmatmul.f32.gmra.mxu0 %v208
    %v248 = vpop.f32.mrf.mxu0
    %v249 = vadd.f32 %v198, %v248
    %250 = vmatmul.f32.gmra.mxu0 %v211
    %v251 = vpop.f32.mrf.mxu0
    %v252 = vadd.f32 %v198, %v251
    %253 = vmatmul.f32.gmra.mxu0 %v214
    %v254 = vpop.f32.mrf.mxu0
    %v255 = vadd.f32 %v198, %v254
    %256 = vmatmul.f32.gmra.mxu0 %v217
    %v257 = vpop.f32.mrf.mxu0
    %v258 = vadd.f32 %v198, %v257
    %259 = vmatmul.f32.gmra.mxu0 %v220
    %v260 = vpop.f32.mrf.mxu0
    %v261 = vadd.f32 %v198, %v260
    %262 = vmatmul.f32.gmra.mxu0 %v223
    %v263 = vpop.f32.mrf.mxu0
    %v264 = vadd.f32 %v198, %v263
    %265 = vdwg.mxu0
    %vm266 = vcmask 785408
    %267 = vst.msk [vmem:[#allocation2] sm:$0xff] %vm266, %v243
    %268 = vst.msk [vmem:[#allocation2 + $0x8] sm:$0xff] %vm266, %v246
    %269 = vst.msk [vmem:[#allocation2 + $0x10] sm:$0xff] %vm266, %v249
    %270 = vst.msk [vmem:[#allocation2 + $0x18] sm:$0xff] %vm266, %v252
    %271 = vst.msk [vmem:[#allocation2 + $0x20] sm:$0xff] %vm266, %v255
    %272 = vst.msk [vmem:[#allocation2 + $0x28] sm:$0xff] %vm266, %v258
    %273 = vst.msk [vmem:[#allocation2 + $0x30] sm:$0xff] %vm266, %v261
    %274 = vst.msk [vmem:[#allocation2 + $0x38] sm:$0xff] %vm266, %v264
    %v275 = vld [vmem:[#allocation7] sm:$0xff]
    %v276 = vld [vmem:[#allocation7 + $0x8] sm:$0xff]
    %v277 = vld [vmem:[#allocation7 + $0x10] sm:$0xff]
    %v278 = vld [vmem:[#allocation7 + $0x18] sm:$0xff]
    %s279 = scalar_lea.vmem [#allocation7], 32
    %v280 = vld [vmem:[%s279] sm:$0xff]
    %v281 = vld [vmem:[%s279 + $0x8] sm:$0xff]
    %v282 = vld [vmem:[%s279 + $0x10] sm:$0xff]
    %v283 = vld [vmem:[%s279 + $0x18] sm:$0xff]
    %s284 = scalar_lea.vmem %s3, 32
    %v285 = vld [vmem:[%s284] sm:$0xff]
    %v286 = vld [vmem:[%s284 + $0x8] sm:$0xff]
    %v287 = vld [vmem:[%s284 + $0x10] sm:$0xff]
    %v288 = vld [vmem:[%s284 + $0x18] sm:$0xff]
    %s289 = scalar_lea.vmem %s5, 1
    %v290 = vld [vmem:[%s289] sm:$0x1]
    %v292 = vperm.slane %v290, 0
    %v294 = vld [vmem:[%s6] sm:$0x1]
    %v296 = vperm.slane %v294, 0
    %s297 = scalar_lea.vmem %s6, 1
    %v298 = vld [vmem:[%s297] sm:$0x1]
    %v300 = vperm.slane %v298, 0
    %v301 = vld [vmem:[#allocation10] sm:$0xff]
    %s302 = scalar_lea.vmem [#allocation10], 8
    %v303 = vld [vmem:[%s302] sm:$0xff]
    %v304 = vld [vmem:[#allocation2] sm:$0xff]
    %v306 = vsel %vm200, %v301, 0
    %308 = vmatpush.msra.mxu0 0.0
    %309 = vmatpush.msra.mxu0 0.0
    %310 = vmatpush.msra.mxu0 0.0
    %311 = vmatpush.msra.mxu0 0.0
    %312 = vmatpush.msra.mxu0 0.0
    %313 = vmatpush.msra.mxu0 0.0
    %314 = vmatpush.msra.mxu0 0.0
    %315 = vmatpush.msra.mxu0 0.0
    %316 = vmatpush.msra.mxu0 0.0
    %317 = vmatpush.msra.mxu0 0.0
    %318 = vmatpush.msra.mxu0 0.0
    %319 = vmatpush.msra.mxu0 0.0
    %320 = vmatpush.msra.mxu0 %v278
    %321 = vmatpush.msra.mxu0 %v277
    %322 = vmatpush.msra.mxu0 %v276
    %323 = vmatpush.msra.mxu0 %v275
    %324 = vmatmul.f32.gmra.mxu0 %v306
    %v325 = vpop.f32.mrf.mxu0
    %v326 = vadd.f32 0.0, %v325
    %327 = vdwg.mxu0
    %v328 = vadd.f32 %v304, %v326
    %v329 = vxor.u32 %v328, 2147483648
    %v330 = vmul.f32 %v329, 1.442695
    %v331 = vpow.pop %v330
    %v332 = vadd.f32 %v331, 1.0
    %v333 = vrcp.pop %v332
    %v334 = vmul.f32 %v332, %v333
    %v335 = vsub.f32 1.0, %v334
    %v336 = vmul.f32 %v333, %v335
    %v337 = vadd.f32 %v333, %v336
    %vm338 = vweird.f32 %v332
    %vm339 = vweird.f32 %v333
    %vm340 = vmor %vm338, %vm339
    %v341 = vsel %vm340, %v333, %v337
    %v342 = vand.u32 2147483647, %v332
    %vm343 = vcmp.eq.f32.partialorder %v342, 8.507059e+37
    %v344 = vand.u32 %v332, 2147483648
    %v345 = vor.u32 1.1754944e-38, %v344
    %v346 = vsel %vm343, %v345, %v341
    %v347 = vmul.f32 1.0, %v346
    %348 = vrot.lane.b32.xlu0 %v296, 64
    %v349 = vpop.permute.xlu0 %348
    %v351 = vadd.f32 %v326, %v349
    %353 = vrot.lane.b32.xlu0 %v351, 64
    %v354 = vpop.permute.xlu0 %353
    %v356 = vmul.f32 %v347, %v354
    %358 = vrot.lane.b32.xlu0 %v356, 64
    %v359 = vpop.permute.xlu0 %358
    %v361 = vadd.f32 %v304, %v359
    %v362 = vtanh.pop %v361
    %v363 = vsub.f32 1.0, %v347
    %365 = vrot.lane.b32.xlu0 %v362, 96
    %v366 = vpop.permute.xlu0 %365
    %v368 = vmul.f32 %v363, %v366
    %369 = vrot.lane.b32.xlu0 %v301, 32
    %v370 = vpop.permute.xlu0 %369
    %v372 = vmul.f32 %v347, %v370
    %v373 = vadd.f32 %v368, %v372
    %375 = vrot.lane.b32.xlu0 %v373, 96
    %v376 = vpop.permute.xlu0 %375
    %v377 = vsel %vm200, %v376, 0
    %379 = vmatpush.msra.mxu0 0.0
    %380 = vmatpush.msra.mxu0 0.0
    %381 = vmatpush.msra.mxu0 0.0
    %382 = vmatpush.msra.mxu0 0.0
    %383 = vmatpush.msra.mxu0 0.0
    %384 = vmatpush.msra.mxu0 0.0
    %385 = vmatpush.msra.mxu0 0.0
    %386 = vmatpush.msra.mxu0 0.0
    %387 = vmatpush.msra.mxu0 0.0
    %388 = vmatpush.msra.mxu0 0.0
    %389 = vmatpush.msra.mxu0 0.0
    %390 = vmatpush.msra.mxu0 0.0
    %391 = vmatpush.msra.mxu0 %v288
    %392 = vmatpush.msra.mxu0 %v287
    %393 = vmatpush.msra.mxu0 %v286
    %394 = vmatpush.msra.mxu0 %v285
    %395 = vmatmul.f32.gmra.mxu0 %v377
    %v396 = vpop.f32.mrf.mxu0
    %v397 = vadd.f32 %v292, %v396
    %398 = vdwg.mxu0
    %v400 = vsel %vm200, %v303, 0
    %402 = vmatpush.msra.mxu0 0.0
    %403 = vmatpush.msra.mxu0 0.0
    %404 = vmatpush.msra.mxu0 0.0
    %405 = vmatpush.msra.mxu0 0.0
    %406 = vmatpush.msra.mxu0 0.0
    %407 = vmatpush.msra.mxu0 0.0
    %408 = vmatpush.msra.mxu0 0.0
    %409 = vmatpush.msra.mxu0 0.0
    %410 = vmatpush.msra.mxu0 0.0
    %411 = vmatpush.msra.mxu0 0.0
    %412 = vmatpush.msra.mxu0 0.0
    %413 = vmatpush.msra.mxu0 0.0
    %414 = vmatpush.msra.mxu0 %v283
    %415 = vmatpush.msra.mxu0 %v282
    %416 = vmatpush.msra.mxu0 %v281
    %417 = vmatpush.msra.mxu0 %v280
    %418 = vmatmul.f32.gmra.mxu0 %v400
    %v419 = vpop.f32.mrf.mxu0
    %v420 = vadd.f32 0.0, %v419
    %421 = vdwg.mxu0
    %v422 = vadd.f32 %v397, %v420
    %v423 = vxor.u32 %v422, 2147483648
    %v424 = vmul.f32 %v423, 1.442695
    %v425 = vpow.pop %v424
    %v426 = vadd.f32 %v425, 1.0
    %v427 = vrcp.pop %v426
    %v428 = vmul.f32 %v426, %v427
    %v429 = vsub.f32 1.0, %v428
    %v430 = vmul.f32 %v427, %v429
    %v431 = vadd.f32 %v427, %v430
    %vm432 = vweird.f32 %v426
    %vm433 = vweird.f32 %v427
    %vm434 = vmor %vm432, %vm433
    %v435 = vsel %vm434, %v427, %v431
    %v436 = vand.u32 2147483647, %v426
    %vm437 = vcmp.eq.f32.partialorder %v436, 8.507059e+37
    %v438 = vand.u32 %v426, 2147483648
    %v439 = vor.u32 1.1754944e-38, %v438
    %v440 = vsel %vm437, %v439, %v435
    %v441 = vmul.f32 1.0, %v440
    %442 = vrot.lane.b32.xlu0 %v300, 64
    %v443 = vpop.permute.xlu0 %442
    %v445 = vadd.f32 %v420, %v443
    %447 = vrot.lane.b32.xlu0 %v445, 64
    %v448 = vpop.permute.xlu0 %447
    %v450 = vmul.f32 %v441, %v448
    %452 = vrot.lane.b32.xlu0 %v450, 64
    %v453 = vpop.permute.xlu0 %452
    %v455 = vadd.f32 %v397, %v453
    %v456 = vtanh.pop %v455
    %v457 = vsub.f32 1.0, %v441
    %459 = vrot.lane.b32.xlu0 %v456, 96
    %v460 = vpop.permute.xlu0 %459
    %v462 = vmul.f32 %v457, %v460
    %463 = vrot.lane.b32.xlu0 %v303, 32
    %v464 = vpop.permute.xlu0 %463
    %v466 = vmul.f32 %v441, %v464
    %v467 = vadd.f32 %v462, %v466
    %469 = vrot.lane.b32.xlu0 %v467, 96
    %v470 = vpop.permute.xlu0 %469
    %472 = vst.msk [vmem:[#allocation3] sm:$0xff] %vm200, %v470
    %v473 = vld [vmem:[#allocation2 + $0x8] sm:$0xff]
    %474 = vmatpush.msra.mxu0 0.0
    %475 = vmatpush.msra.mxu0 0.0
    %476 = vmatpush.msra.mxu0 0.0
    %477 = vmatpush.msra.mxu0 0.0
    %478 = vmatpush.msra.mxu0 0.0
    %479 = vmatpush.msra.mxu0 0.0
    %480 = vmatpush.msra.mxu0 0.0
    %481 = vmatpush.msra.mxu0 0.0
    %482 = vmatpush.msra.mxu0 0.0
    %483 = vmatpush.msra.mxu0 0.0
    %484 = vmatpush.msra.mxu0 0.0
    %485 = vmatpush.msra.mxu0 0.0
    %486 = vmatpush.msra.mxu0 %v278
    %487 = vmatpush.msra.mxu0 %v277
    %488 = vmatpush.msra.mxu0 %v276
    %489 = vmatpush.msra.mxu0 %v275
    %490 = vmatmul.f32.gmra.mxu0 %v377
    %v491 = vpop.f32.mrf.mxu0
    %v492 = vadd.f32 0.0, %v491
    %493 = vdwg.mxu0
    %v494 = vadd.f32 %v473, %v492
    %v495 = vxor.u32 %v494, 2147483648
    %v496 = vmul.f32 %v495, 1.442695
    %v497 = vpow.pop %v496
    %v498 = vadd.f32 %v497, 1.0
    %v499 = vrcp.pop %v498
    %v500 = vmul.f32 %v498, %v499
    %v501 = vsub.f32 1.0, %v500
    %v502 = vmul.f32 %v499, %v501
    %v503 = vadd.f32 %v499, %v502
    %vm504 = vweird.f32 %v498
    %vm505 = vweird.f32 %v499
    %vm506 = vmor %vm504, %vm505
    %v507 = vsel %vm506, %v499, %v503
    %v508 = vand.u32 2147483647, %v498
    %vm509 = vcmp.eq.f32.partialorder %v508, 8.507059e+37
    %v510 = vand.u32 %v498, 2147483648
    %v511 = vor.u32 1.1754944e-38, %v510
    %v512 = vsel %vm509, %v511, %v507
    %v513 = vmul.f32 1.0, %v512
    %v514 = vadd.f32 %v492, %v349
    %516 = vrot.lane.b32.xlu0 %v514, 64
    %v517 = vpop.permute.xlu0 %516
    %v519 = vmul.f32 %v513, %v517
    %521 = vrot.lane.b32.xlu0 %v519, 64
    %v522 = vpop.permute.xlu0 %521
    %v524 = vadd.f32 %v473, %v522
    %v525 = vtanh.pop %v524
    %v526 = vsub.f32 1.0, %v513
    %528 = vrot.lane.b32.xlu0 %v525, 96
    %v529 = vpop.permute.xlu0 %528
    %v531 = vmul.f32 %v526, %v529
    %v532 = vmul.f32 %v513, %v373
    %v533 = vadd.f32 %v531, %v532
    %535 = vrot.lane.b32.xlu0 %v533, 96
    %v536 = vpop.permute.xlu0 %535
    %v537 = vsel %vm200, %v536, 0
    %539 = vmatpush.msra.mxu0 0.0
    %540 = vmatpush.msra.mxu0 0.0
    %541 = vmatpush.msra.mxu0 0.0
    %542 = vmatpush.msra.mxu0 0.0
    %543 = vmatpush.msra.mxu0 0.0
    %544 = vmatpush.msra.mxu0 0.0
    %545 = vmatpush.msra.mxu0 0.0
    %546 = vmatpush.msra.mxu0 0.0
    %547 = vmatpush.msra.mxu0 0.0
    %548 = vmatpush.msra.mxu0 0.0
    %549 = vmatpush.msra.mxu0 0.0
    %550 = vmatpush.msra.mxu0 0.0
    %551 = vmatpush.msra.mxu0 %v288
    %552 = vmatpush.msra.mxu0 %v287
    %553 = vmatpush.msra.mxu0 %v286
    %554 = vmatpush.msra.mxu0 %v285
    %555 = vmatmul.f32.gmra.mxu0 %v537
    %v556 = vpop.f32.mrf.mxu0
    %v557 = vadd.f32 %v292, %v556
    %558 = vdwg.mxu0
    %v559 = vsel %vm200, %v470, 0
    %561 = vmatpush.msra.mxu0 0.0
    %562 = vmatpush.msra.mxu0 0.0
    %563 = vmatpush.msra.mxu0 0.0
    %564 = vmatpush.msra.mxu0 0.0
    %565 = vmatpush.msra.mxu0 0.0
    %566 = vmatpush.msra.mxu0 0.0
    %567 = vmatpush.msra.mxu0 0.0
    %568 = vmatpush.msra.mxu0 0.0
    %569 = vmatpush.msra.mxu0 0.0
    %570 = vmatpush.msra.mxu0 0.0
    %571 = vmatpush.msra.mxu0 0.0
    %572 = vmatpush.msra.mxu0 0.0
    %573 = vmatpush.msra.mxu0 %v283
    %574 = vmatpush.msra.mxu0 %v282
    %575 = vmatpush.msra.mxu0 %v281
    %576 = vmatpush.msra.mxu0 %v280
    %577 = vmatmul.f32.gmra.mxu0 %v559
    %v578 = vpop.f32.mrf.mxu0
    %v579 = vadd.f32 0.0, %v578
    %580 = vdwg.mxu0
    %v581 = vadd.f32 %v557, %v579
    %v582 = vxor.u32 %v581, 2147483648
    %v583 = vmul.f32 %v582, 1.442695
    %v584 = vpow.pop %v583
    %v585 = vadd.f32 %v584, 1.0
    %v586 = vrcp.pop %v585
    %v587 = vmul.f32 %v585, %v586
    %v588 = vsub.f32 1.0, %v587
    %v589 = vmul.f32 %v586, %v588
    %v590 = vadd.f32 %v586, %v589
    %vm591 = vweird.f32 %v585
    %vm592 = vweird.f32 %v586
    %vm593 = vmor %vm591, %vm592
    %v594 = vsel %vm593, %v586, %v590
    %v595 = vand.u32 2147483647, %v585
    %vm596 = vcmp.eq.f32.partialorder %v595, 8.507059e+37
    %v597 = vand.u32 %v585, 2147483648
    %v598 = vor.u32 1.1754944e-38, %v597
    %v599 = vsel %vm596, %v598, %v594
    %v600 = vmul.f32 1.0, %v599
    %v601 = vadd.f32 %v579, %v443
    %603 = vrot.lane.b32.xlu0 %v601, 64
    %v604 = vpop.permute.xlu0 %603
    %v606 = vmul.f32 %v600, %v604
    %608 = vrot.lane.b32.xlu0 %v606, 64
    %v609 = vpop.permute.xlu0 %608
    %v611 = vadd.f32 %v557, %v609
    %v612 = vtanh.pop %v611
    %v613 = vsub.f32 1.0, %v600
    %615 = vrot.lane.b32.xlu0 %v612, 96
    %v616 = vpop.permute.xlu0 %615
    %v618 = vmul.f32 %v613, %v616
    %v619 = vmul.f32 %v600, %v467
    %v620 = vadd.f32 %v618, %v619
    %622 = vrot.lane.b32.xlu0 %v620, 96
    %v623 = vpop.permute.xlu0 %622
    %625 = vst.msk [vmem:[#allocation3 + $0x8] sm:$0xff] %vm200, %v623
    %v626 = vld [vmem:[#allocation2 + $0x10] sm:$0xff]
    %627 = vmatpush.msra.mxu0 0.0
    %628 = vmatpush.msra.mxu0 0.0
    %629 = vmatpush.msra.mxu0 0.0
    %630 = vmatpush.msra.mxu0 0.0
    %631 = vmatpush.msra.mxu0 0.0
    %632 = vmatpush.msra.mxu0 0.0
    %633 = vmatpush.msra.mxu0 0.0
    %634 = vmatpush.msra.mxu0 0.0
    %635 = vmatpush.msra.mxu0 0.0
    %636 = vmatpush.msra.mxu0 0.0
    %637 = vmatpush.msra.mxu0 0.0
    %638 = vmatpush.msra.mxu0 0.0
    %639 = vmatpush.msra.mxu0 %v278
    %640 = vmatpush.msra.mxu0 %v277
    %641 = vmatpush.msra.mxu0 %v276
    %642 = vmatpush.msra.mxu0 %v275
    %643 = vmatmul.f32.gmra.mxu0 %v537
    %v644 = vpop.f32.mrf.mxu0
    %v645 = vadd.f32 0.0, %v644
    %646 = vdwg.mxu0
    %v647 = vadd.f32 %v626, %v645
    %v648 = vxor.u32 %v647, 2147483648
    %v649 = vmul.f32 %v648, 1.442695
    %v650 = vpow.pop %v649
    %v651 = vadd.f32 %v650, 1.0
    %v652 = vrcp.pop %v651
    %v653 = vmul.f32 %v651, %v652
    %v654 = vsub.f32 1.0, %v653
    %v655 = vmul.f32 %v652, %v654
    %v656 = vadd.f32 %v652, %v655
    %vm657 = vweird.f32 %v651
    %vm658 = vweird.f32 %v652
    %vm659 = vmor %vm657, %vm658
    %v660 = vsel %vm659, %v652, %v656
    %v661 = vand.u32 2147483647, %v651
    %vm662 = vcmp.eq.f32.partialorder %v661, 8.507059e+37
    %v663 = vand.u32 %v651, 2147483648
    %v664 = vor.u32 1.1754944e-38, %v663
    %v665 = vsel %vm662, %v664, %v660
    %v666 = vmul.f32 1.0, %v665
    %v667 = vadd.f32 %v645, %v349
    %669 = vrot.lane.b32.xlu0 %v667, 64
    %v670 = vpop.permute.xlu0 %669
    %v672 = vmul.f32 %v666, %v670
    %674 = vrot.lane.b32.xlu0 %v672, 64
    %v675 = vpop.permute.xlu0 %674
    %v677 = vadd.f32 %v626, %v675
    %v678 = vtanh.pop %v677
    %v679 = vsub.f32 1.0, %v666
    %681 = vrot.lane.b32.xlu0 %v678, 96
    %v682 = vpop.permute.xlu0 %681
    %v684 = vmul.f32 %v679, %v682
    %v685 = vmul.f32 %v666, %v533
    %v686 = vadd.f32 %v684, %v685
    %688 = vrot.lane.b32.xlu0 %v686, 96
    %v689 = vpop.permute.xlu0 %688
    %v690 = vsel %vm200, %v689, 0
    %692 = vmatpush.msra.mxu0 0.0
    %693 = vmatpush.msra.mxu0 0.0
    %694 = vmatpush.msra.mxu0 0.0
    %695 = vmatpush.msra.mxu0 0.0
    %696 = vmatpush.msra.mxu0 0.0
    %697 = vmatpush.msra.mxu0 0.0
    %698 = vmatpush.msra.mxu0 0.0
    %699 = vmatpush.msra.mxu0 0.0
    %700 = vmatpush.msra.mxu0 0.0
    %701 = vmatpush.msra.mxu0 0.0
    %702 = vmatpush.msra.mxu0 0.0
    %703 = vmatpush.msra.mxu0 0.0
    %704 = vmatpush.msra.mxu0 %v288
    %705 = vmatpush.msra.mxu0 %v287
    %706 = vmatpush.msra.mxu0 %v286
    %707 = vmatpush.msra.mxu0 %v285
    %708 = vmatmul.f32.gmra.mxu0 %v690
    %v709 = vpop.f32.mrf.mxu0
    %v710 = vadd.f32 %v292, %v709
    %711 = vdwg.mxu0
    %v712 = vsel %vm200, %v623, 0
    %714 = vmatpush.msra.mxu0 0.0
    %715 = vmatpush.msra.mxu0 0.0
    %716 = vmatpush.msra.mxu0 0.0
    %717 = vmatpush.msra.mxu0 0.0
    %718 = vmatpush.msra.mxu0 0.0
    %719 = vmatpush.msra.mxu0 0.0
    %720 = vmatpush.msra.mxu0 0.0
    %721 = vmatpush.msra.mxu0 0.0
    %722 = vmatpush.msra.mxu0 0.0
    %723 = vmatpush.msra.mxu0 0.0
    %724 = vmatpush.msra.mxu0 0.0
    %725 = vmatpush.msra.mxu0 0.0
    %726 = vmatpush.msra.mxu0 %v283
    %727 = vmatpush.msra.mxu0 %v282
    %728 = vmatpush.msra.mxu0 %v281
    %729 = vmatpush.msra.mxu0 %v280
    %730 = vmatmul.f32.gmra.mxu0 %v712
    %v731 = vpop.f32.mrf.mxu0
    %v732 = vadd.f32 0.0, %v731
    %733 = vdwg.mxu0
    %v734 = vadd.f32 %v710, %v732
    %v735 = vxor.u32 %v734, 2147483648
    %v736 = vmul.f32 %v735, 1.442695
    %v737 = vpow.pop %v736
    %v738 = vadd.f32 %v737, 1.0
    %v739 = vrcp.pop %v738
    %v740 = vmul.f32 %v738, %v739
    %v741 = vsub.f32 1.0, %v740
    %v742 = vmul.f32 %v739, %v741
    %v743 = vadd.f32 %v739, %v742
    %vm744 = vweird.f32 %v738
    %vm745 = vweird.f32 %v739
    %vm746 = vmor %vm744, %vm745
    %v747 = vsel %vm746, %v739, %v743
    %v748 = vand.u32 2147483647, %v738
    %vm749 = vcmp.eq.f32.partialorder %v748, 8.507059e+37
    %v750 = vand.u32 %v738, 2147483648
    %v751 = vor.u32 1.1754944e-38, %v750
    %v752 = vsel %vm749, %v751, %v747
    %v753 = vmul.f32 1.0, %v752
    %v754 = vadd.f32 %v732, %v443
    %756 = vrot.lane.b32.xlu0 %v754, 64
    %v757 = vpop.permute.xlu0 %756
    %v759 = vmul.f32 %v753, %v757
    %761 = vrot.lane.b32.xlu0 %v759, 64
    %v762 = vpop.permute.xlu0 %761
    %v764 = vadd.f32 %v710, %v762
    %v765 = vtanh.pop %v764
    %v766 = vsub.f32 1.0, %v753
    %768 = vrot.lane.b32.xlu0 %v765, 96
    %v769 = vpop.permute.xlu0 %768
    %v771 = vmul.f32 %v766, %v769
    %v772 = vmul.f32 %v753, %v620
    %v773 = vadd.f32 %v771, %v772
    %775 = vrot.lane.b32.xlu0 %v773, 96
    %v776 = vpop.permute.xlu0 %775
    %778 = vst.msk [vmem:[#allocation3 + $0x10] sm:$0xff] %vm200, %v776
    %v779 = vld [vmem:[#allocation2 + $0x18] sm:$0xff]
    %780 = vmatpush.msra.mxu0 0.0
    %781 = vmatpush.msra.mxu0 0.0
    %782 = vmatpush.msra.mxu0 0.0
    %783 = vmatpush.msra.mxu0 0.0
    %784 = vmatpush.msra.mxu0 0.0
    %785 = vmatpush.msra.mxu0 0.0
    %786 = vmatpush.msra.mxu0 0.0
    %787 = vmatpush.msra.mxu0 0.0
    %788 = vmatpush.msra.mxu0 0.0
    %789 = vmatpush.msra.mxu0 0.0
    %790 = vmatpush.msra.mxu0 0.0
    %791 = vmatpush.msra.mxu0 0.0
    %792 = vmatpush.msra.mxu0 %v278
    %793 = vmatpush.msra.mxu0 %v277
    %794 = vmatpush.msra.mxu0 %v276
    %795 = vmatpush.msra.mxu0 %v275
    %796 = vmatmul.f32.gmra.mxu0 %v690
    %v797 = vpop.f32.mrf.mxu0
    %v798 = vadd.f32 0.0, %v797
    %799 = vdwg.mxu0
    %v800 = vadd.f32 %v779, %v798
    %v801 = vxor.u32 %v800, 2147483648
    %v802 = vmul.f32 %v801, 1.442695
    %v803 = vpow.pop %v802
    %v804 = vadd.f32 %v803, 1.0
    %v805 = vrcp.pop %v804
    %v806 = vmul.f32 %v804, %v805
    %v807 = vsub.f32 1.0, %v806
    %v808 = vmul.f32 %v805, %v807
    %v809 = vadd.f32 %v805, %v808
    %vm810 = vweird.f32 %v804
    %vm811 = vweird.f32 %v805
    %vm812 = vmor %vm810, %vm811
    %v813 = vsel %vm812, %v805, %v809
    %v814 = vand.u32 2147483647, %v804
    %vm815 = vcmp.eq.f32.partialorder %v814, 8.507059e+37
    %v816 = vand.u32 %v804, 2147483648
    %v817 = vor.u32 1.1754944e-38, %v816
    %v818 = vsel %vm815, %v817, %v813
    %v819 = vmul.f32 1.0, %v818
    %v820 = vadd.f32 %v798, %v349
    %822 = vrot.lane.b32.xlu0 %v820, 64
    %v823 = vpop.permute.xlu0 %822
    %v825 = vmul.f32 %v819, %v823
    %827 = vrot.lane.b32.xlu0 %v825, 64
    %v828 = vpop.permute.xlu0 %827
    %v830 = vadd.f32 %v779, %v828
    %v831 = vtanh.pop %v830
    %v832 = vsub.f32 1.0, %v819
    %834 = vrot.lane.b32.xlu0 %v831, 96
    %v835 = vpop.permute.xlu0 %834
    %v837 = vmul.f32 %v832, %v835
    %v838 = vmul.f32 %v819, %v686
    %v839 = vadd.f32 %v837, %v838
    %841 = vrot.lane.b32.xlu0 %v839, 96
    %v842 = vpop.permute.xlu0 %841
    %v843 = vsel %vm200, %v842, 0
    %845 = vmatpush.msra.mxu0 0.0
    %846 = vmatpush.msra.mxu0 0.0
    %847 = vmatpush.msra.mxu0 0.0
    %848 = vmatpush.msra.mxu0 0.0
    %849 = vmatpush.msra.mxu0 0.0
    %850 = vmatpush.msra.mxu0 0.0
    %851 = vmatpush.msra.mxu0 0.0
    %852 = vmatpush.msra.mxu0 0.0
    %853 = vmatpush.msra.mxu0 0.0
    %854 = vmatpush.msra.mxu0 0.0
    %855 = vmatpush.msra.mxu0 0.0
    %856 = vmatpush.msra.mxu0 0.0
    %857 = vmatpush.msra.mxu0 %v288
    %858 = vmatpush.msra.mxu0 %v287
    %859 = vmatpush.msra.mxu0 %v286
    %860 = vmatpush.msra.mxu0 %v285
    %861 = vmatmul.f32.gmra.mxu0 %v843
    %v862 = vpop.f32.mrf.mxu0
    %v863 = vadd.f32 %v292, %v862
    %864 = vdwg.mxu0
    %v865 = vsel %vm200, %v776, 0
    %867 = vmatpush.msra.mxu0 0.0
    %868 = vmatpush.msra.mxu0 0.0
    %869 = vmatpush.msra.mxu0 0.0
    %870 = vmatpush.msra.mxu0 0.0
    %871 = vmatpush.msra.mxu0 0.0
    %872 = vmatpush.msra.mxu0 0.0
    %873 = vmatpush.msra.mxu0 0.0
    %874 = vmatpush.msra.mxu0 0.0
    %875 = vmatpush.msra.mxu0 0.0
    %876 = vmatpush.msra.mxu0 0.0
    %877 = vmatpush.msra.mxu0 0.0
    %878 = vmatpush.msra.mxu0 0.0
    %879 = vmatpush.msra.mxu0 %v283
    %880 = vmatpush.msra.mxu0 %v282
    %881 = vmatpush.msra.mxu0 %v281
    %882 = vmatpush.msra.mxu0 %v280
    %883 = vmatmul.f32.gmra.mxu0 %v865
    %v884 = vpop.f32.mrf.mxu0
    %v885 = vadd.f32 0.0, %v884
    %886 = vdwg.mxu0
    %v887 = vadd.f32 %v863, %v885
    %v888 = vxor.u32 %v887, 2147483648
    %v889 = vmul.f32 %v888, 1.442695
    %v890 = vpow.pop %v889
    %v891 = vadd.f32 %v890, 1.0
    %v892 = vrcp.pop %v891
    %v893 = vmul.f32 %v891, %v892
    %v894 = vsub.f32 1.0, %v893
    %v895 = vmul.f32 %v892, %v894
    %v896 = vadd.f32 %v892, %v895
    %vm897 = vweird.f32 %v891
    %vm898 = vweird.f32 %v892
    %vm899 = vmor %vm897, %vm898
    %v900 = vsel %vm899, %v892, %v896
    %v901 = vand.u32 2147483647, %v891
    %vm902 = vcmp.eq.f32.partialorder %v901, 8.507059e+37
    %v903 = vand.u32 %v891, 2147483648
    %v904 = vor.u32 1.1754944e-38, %v903
    %v905 = vsel %vm902, %v904, %v900
    %v906 = vmul.f32 1.0, %v905
    %v907 = vadd.f32 %v885, %v443
    %909 = vrot.lane.b32.xlu0 %v907, 64
    %v910 = vpop.permute.xlu0 %909
    %v912 = vmul.f32 %v906, %v910
    %914 = vrot.lane.b32.xlu0 %v912, 64
    %v915 = vpop.permute.xlu0 %914
    %v917 = vadd.f32 %v863, %v915
    %v918 = vtanh.pop %v917
    %v919 = vsub.f32 1.0, %v906
    %921 = vrot.lane.b32.xlu0 %v918, 96
    %v922 = vpop.permute.xlu0 %921
    %v924 = vmul.f32 %v919, %v922
    %v925 = vmul.f32 %v906, %v773
    %v926 = vadd.f32 %v924, %v925
    %928 = vrot.lane.b32.xlu0 %v926, 96
    %v929 = vpop.permute.xlu0 %928
    %931 = vst.msk [vmem:[#allocation3 + $0x18] sm:$0xff] %vm200, %v929
    %v932 = vld [vmem:[#allocation2 + $0x20] sm:$0xff]
    %933 = vmatpush.msra.mxu0 0.0
    %934 = vmatpush.msra.mxu0 0.0
    %935 = vmatpush.msra.mxu0 0.0
    %936 = vmatpush.msra.mxu0 0.0
    %937 = vmatpush.msra.mxu0 0.0
    %938 = vmatpush.msra.mxu0 0.0
    %939 = vmatpush.msra.mxu0 0.0
    %940 = vmatpush.msra.mxu0 0.0
    %941 = vmatpush.msra.mxu0 0.0
    %942 = vmatpush.msra.mxu0 0.0
    %943 = vmatpush.msra.mxu0 0.0
    %944 = vmatpush.msra.mxu0 0.0
    %945 = vmatpush.msra.mxu0 %v278
    %946 = vmatpush.msra.mxu0 %v277
    %947 = vmatpush.msra.mxu0 %v276
    %948 = vmatpush.msra.mxu0 %v275
    %949 = vmatmul.f32.gmra.mxu0 %v843
    %v950 = vpop.f32.mrf.mxu0
    %v951 = vadd.f32 0.0, %v950
    %952 = vdwg.mxu0
    %v953 = vadd.f32 %v932, %v951
    %v954 = vxor.u32 %v953, 2147483648
    %v955 = vmul.f32 %v954, 1.442695
    %v956 = vpow.pop %v955
    %v957 = vadd.f32 %v956, 1.0
    %v958 = vrcp.pop %v957
    %v959 = vmul.f32 %v957, %v958
    %v960 = vsub.f32 1.0, %v959
    %v961 = vmul.f32 %v958, %v960
    %v962 = vadd.f32 %v958, %v961
    %vm963 = vweird.f32 %v957
    %vm964 = vweird.f32 %v958
    %vm965 = vmor %vm963, %vm964
    %v966 = vsel %vm965, %v958, %v962
    %v967 = vand.u32 2147483647, %v957
    %vm968 = vcmp.eq.f32.partialorder %v967, 8.507059e+37
    %v969 = vand.u32 %v957, 2147483648
    %v970 = vor.u32 1.1754944e-38, %v969
    %v971 = vsel %vm968, %v970, %v966
    %v972 = vmul.f32 1.0, %v971
    %v973 = vadd.f32 %v951, %v349
    %975 = vrot.lane.b32.xlu0 %v973, 64
    %v976 = vpop.permute.xlu0 %975
    %v978 = vmul.f32 %v972, %v976
    %980 = vrot.lane.b32.xlu0 %v978, 64
    %v981 = vpop.permute.xlu0 %980
    %v983 = vadd.f32 %v932, %v981
    %v984 = vtanh.pop %v983
    %v985 = vsub.f32 1.0, %v972
    %987 = vrot.lane.b32.xlu0 %v984, 96
    %v988 = vpop.permute.xlu0 %987
    %v990 = vmul.f32 %v985, %v988
    %v991 = vmul.f32 %v972, %v839
    %v992 = vadd.f32 %v990, %v991
    %994 = vrot.lane.b32.xlu0 %v992, 96
    %v995 = vpop.permute.xlu0 %994
    %v996 = vsel %vm200, %v995, 0
    %998 = vmatpush.msra.mxu0 0.0
    %999 = vmatpush.msra.mxu0 0.0
    %1000 = vmatpush.msra.mxu0 0.0
    %1001 = vmatpush.msra.mxu0 0.0
    %1002 = vmatpush.msra.mxu0 0.0
    %1003 = vmatpush.msra.mxu0 0.0
    %1004 = vmatpush.msra.mxu0 0.0
    %1005 = vmatpush.msra.mxu0 0.0
    %1006 = vmatpush.msra.mxu0 0.0
    %1007 = vmatpush.msra.mxu0 0.0
    %1008 = vmatpush.msra.mxu0 0.0
    %1009 = vmatpush.msra.mxu0 0.0
    %1010 = vmatpush.msra.mxu0 %v288
    %1011 = vmatpush.msra.mxu0 %v287
    %1012 = vmatpush.msra.mxu0 %v286
    %1013 = vmatpush.msra.mxu0 %v285
    %1014 = vmatmul.f32.gmra.mxu0 %v996
    %v1015 = vpop.f32.mrf.mxu0
    %v1016 = vadd.f32 %v292, %v1015
    %1017 = vdwg.mxu0
    %v1018 = vsel %vm200, %v929, 0
    %1020 = vmatpush.msra.mxu0 0.0
    %1021 = vmatpush.msra.mxu0 0.0
    %1022 = vmatpush.msra.mxu0 0.0
    %1023 = vmatpush.msra.mxu0 0.0
    %1024 = vmatpush.msra.mxu0 0.0
    %1025 = vmatpush.msra.mxu0 0.0
    %1026 = vmatpush.msra.mxu0 0.0
    %1027 = vmatpush.msra.mxu0 0.0
    %1028 = vmatpush.msra.mxu0 0.0
    %1029 = vmatpush.msra.mxu0 0.0
    %1030 = vmatpush.msra.mxu0 0.0
    %1031 = vmatpush.msra.mxu0 0.0
    %1032 = vmatpush.msra.mxu0 %v283
    %1033 = vmatpush.msra.mxu0 %v282
    %1034 = vmatpush.msra.mxu0 %v281
    %1035 = vmatpush.msra.mxu0 %v280
    %1036 = vmatmul.f32.gmra.mxu0 %v1018
    %v1037 = vpop.f32.mrf.mxu0
    %v1038 = vadd.f32 0.0, %v1037
    %1039 = vdwg.mxu0
    %v1040 = vadd.f32 %v1016, %v1038
    %v1041 = vxor.u32 %v1040, 2147483648
    %v1042 = vmul.f32 %v1041, 1.442695
    %v1043 = vpow.pop %v1042
    %v1044 = vadd.f32 %v1043, 1.0
    %v1045 = vrcp.pop %v1044
    %v1046 = vmul.f32 %v1044, %v1045
    %v1047 = vsub.f32 1.0, %v1046
    %v1048 = vmul.f32 %v1045, %v1047
    %v1049 = vadd.f32 %v1045, %v1048
    %vm1050 = vweird.f32 %v1044
    %vm1051 = vweird.f32 %v1045
    %vm1052 = vmor %vm1050, %vm1051
    %v1053 = vsel %vm1052, %v1045, %v1049
    %v1054 = vand.u32 2147483647, %v1044
    %vm1055 = vcmp.eq.f32.partialorder %v1054, 8.507059e+37
    %v1056 = vand.u32 %v1044, 2147483648
    %v1057 = vor.u32 1.1754944e-38, %v1056
    %v1058 = vsel %vm1055, %v1057, %v1053
    %v1059 = vmul.f32 1.0, %v1058
    %v1060 = vadd.f32 %v1038, %v443
    %1062 = vrot.lane.b32.xlu0 %v1060, 64
    %v1063 = vpop.permute.xlu0 %1062
    %v1065 = vmul.f32 %v1059, %v1063
    %1067 = vrot.lane.b32.xlu0 %v1065, 64
    %v1068 = vpop.permute.xlu0 %1067
    %v1070 = vadd.f32 %v1016, %v1068
    %v1071 = vtanh.pop %v1070
    %v1072 = vsub.f32 1.0, %v1059
    %1074 = vrot.lane.b32.xlu0 %v1071, 96
    %v1075 = vpop.permute.xlu0 %1074
    %v1077 = vmul.f32 %v1072, %v1075
    %v1078 = vmul.f32 %v1059, %v926
    %v1079 = vadd.f32 %v1077, %v1078
    %1081 = vrot.lane.b32.xlu0 %v1079, 96
    %v1082 = vpop.permute.xlu0 %1081
    %1084 = vst.msk [vmem:[#allocation3 + $0x20] sm:$0xff] %vm200, %v1082
    %v1085 = vld [vmem:[#allocation2 + $0x28] sm:$0xff]
    %1086 = vmatpush.msra.mxu0 0.0
    %1087 = vmatpush.msra.mxu0 0.0
    %1088 = vmatpush.msra.mxu0 0.0
    %1089 = vmatpush.msra.mxu0 0.0
    %1090 = vmatpush.msra.mxu0 0.0
    %1091 = vmatpush.msra.mxu0 0.0
    %1092 = vmatpush.msra.mxu0 0.0
    %1093 = vmatpush.msra.mxu0 0.0
    %1094 = vmatpush.msra.mxu0 0.0
    %1095 = vmatpush.msra.mxu0 0.0
    %1096 = vmatpush.msra.mxu0 0.0
    %1097 = vmatpush.msra.mxu0 0.0
    %1098 = vmatpush.msra.mxu0 %v278
    %1099 = vmatpush.msra.mxu0 %v277
    %1100 = vmatpush.msra.mxu0 %v276
    %1101 = vmatpush.msra.mxu0 %v275
    %1102 = vmatmul.f32.gmra.mxu0 %v996
    %v1103 = vpop.f32.mrf.mxu0
    %v1104 = vadd.f32 0.0, %v1103
    %1105 = vdwg.mxu0
    %v1106 = vadd.f32 %v1085, %v1104
    %v1107 = vxor.u32 %v1106, 2147483648
    %v1108 = vmul.f32 %v1107, 1.442695
    %v1109 = vpow.pop %v1108
    %v1110 = vadd.f32 %v1109, 1.0
    %v1111 = vrcp.pop %v1110
    %v1112 = vmul.f32 %v1110, %v1111
    %v1113 = vsub.f32 1.0, %v1112
    %v1114 = vmul.f32 %v1111, %v1113
    %v1115 = vadd.f32 %v1111, %v1114
    %vm1116 = vweird.f32 %v1110
    %vm1117 = vweird.f32 %v1111
    %vm1118 = vmor %vm1116, %vm1117
    %v1119 = vsel %vm1118, %v1111, %v1115
    %v1120 = vand.u32 2147483647, %v1110
    %vm1121 = vcmp.eq.f32.partialorder %v1120, 8.507059e+37
    %v1122 = vand.u32 %v1110, 2147483648
    %v1123 = vor.u32 1.1754944e-38, %v1122
    %v1124 = vsel %vm1121, %v1123, %v1119
    %v1125 = vmul.f32 1.0, %v1124
    %v1126 = vadd.f32 %v1104, %v349
    %1128 = vrot.lane.b32.xlu0 %v1126, 64
    %v1129 = vpop.permute.xlu0 %1128
    %v1131 = vmul.f32 %v1125, %v1129
    %1133 = vrot.lane.b32.xlu0 %v1131, 64
    %v1134 = vpop.permute.xlu0 %1133
    %v1136 = vadd.f32 %v1085, %v1134
    %v1137 = vtanh.pop %v1136
    %v1138 = vsub.f32 1.0, %v1125
    %1140 = vrot.lane.b32.xlu0 %v1137, 96
    %v1141 = vpop.permute.xlu0 %1140
    %v1143 = vmul.f32 %v1138, %v1141
    %v1144 = vmul.f32 %v1125, %v992
    %v1145 = vadd.f32 %v1143, %v1144
    %1147 = vrot.lane.b32.xlu0 %v1145, 96
    %v1148 = vpop.permute.xlu0 %1147
    %v1149 = vsel %vm200, %v1148, 0
    %1151 = vmatpush.msra.mxu0 0.0
    %1152 = vmatpush.msra.mxu0 0.0
    %1153 = vmatpush.msra.mxu0 0.0
    %1154 = vmatpush.msra.mxu0 0.0
    %1155 = vmatpush.msra.mxu0 0.0
    %1156 = vmatpush.msra.mxu0 0.0
    %1157 = vmatpush.msra.mxu0 0.0
    %1158 = vmatpush.msra.mxu0 0.0
    %1159 = vmatpush.msra.mxu0 0.0
    %1160 = vmatpush.msra.mxu0 0.0
    %1161 = vmatpush.msra.mxu0 0.0
    %1162 = vmatpush.msra.mxu0 0.0
    %1163 = vmatpush.msra.mxu0 %v288
    %1164 = vmatpush.msra.mxu0 %v287
    %1165 = vmatpush.msra.mxu0 %v286
    %1166 = vmatpush.msra.mxu0 %v285
    %1167 = vmatmul.f32.gmra.mxu0 %v1149
    %v1168 = vpop.f32.mrf.mxu0
    %v1169 = vadd.f32 %v292, %v1168
    %1170 = vdwg.mxu0
    %v1171 = vsel %vm200, %v1082, 0
    %1173 = vmatpush.msra.mxu0 0.0
    %1174 = vmatpush.msra.mxu0 0.0
    %1175 = vmatpush.msra.mxu0 0.0
    %1176 = vmatpush.msra.mxu0 0.0
    %1177 = vmatpush.msra.mxu0 0.0
    %1178 = vmatpush.msra.mxu0 0.0
    %1179 = vmatpush.msra.mxu0 0.0
    %1180 = vmatpush.msra.mxu0 0.0
    %1181 = vmatpush.msra.mxu0 0.0
    %1182 = vmatpush.msra.mxu0 0.0
    %1183 = vmatpush.msra.mxu0 0.0
    %1184 = vmatpush.msra.mxu0 0.0
    %1185 = vmatpush.msra.mxu0 %v283
    %1186 = vmatpush.msra.mxu0 %v282
    %1187 = vmatpush.msra.mxu0 %v281
    %1188 = vmatpush.msra.mxu0 %v280
    %1189 = vmatmul.f32.gmra.mxu0 %v1171
    %v1190 = vpop.f32.mrf.mxu0
    %v1191 = vadd.f32 0.0, %v1190
    %1192 = vdwg.mxu0
    %v1193 = vadd.f32 %v1169, %v1191
    %v1194 = vxor.u32 %v1193, 2147483648
    %v1195 = vmul.f32 %v1194, 1.442695
    %v1196 = vpow.pop %v1195
    %v1197 = vadd.f32 %v1196, 1.0
    %v1198 = vrcp.pop %v1197
    %v1199 = vmul.f32 %v1197, %v1198
    %v1200 = vsub.f32 1.0, %v1199
    %v1201 = vmul.f32 %v1198, %v1200
    %v1202 = vadd.f32 %v1198, %v1201
    %vm1203 = vweird.f32 %v1197
    %vm1204 = vweird.f32 %v1198
    %vm1205 = vmor %vm1203, %vm1204
    %v1206 = vsel %vm1205, %v1198, %v1202
    %v1207 = vand.u32 2147483647, %v1197
    %vm1208 = vcmp.eq.f32.partialorder %v1207, 8.507059e+37
    %v1209 = vand.u32 %v1197, 2147483648
    %v1210 = vor.u32 1.1754944e-38, %v1209
    %v1211 = vsel %vm1208, %v1210, %v1206
    %v1212 = vmul.f32 1.0, %v1211
    %v1213 = vadd.f32 %v1191, %v443
    %1215 = vrot.lane.b32.xlu0 %v1213, 64
    %v1216 = vpop.permute.xlu0 %1215
    %v1218 = vmul.f32 %v1212, %v1216
    %1220 = vrot.lane.b32.xlu0 %v1218, 64
    %v1221 = vpop.permute.xlu0 %1220
    %v1223 = vadd.f32 %v1169, %v1221
    %v1224 = vtanh.pop %v1223
    %v1225 = vsub.f32 1.0, %v1212
    %1227 = vrot.lane.b32.xlu0 %v1224, 96
    %v1228 = vpop.permute.xlu0 %1227
    %v1230 = vmul.f32 %v1225, %v1228
    %v1231 = vmul.f32 %v1212, %v1079
    %v1232 = vadd.f32 %v1230, %v1231
    %1234 = vrot.lane.b32.xlu0 %v1232, 96
    %v1235 = vpop.permute.xlu0 %1234
    %1237 = vst.msk [vmem:[#allocation3 + $0x28] sm:$0xff] %vm200, %v1235
    %v1238 = vld [vmem:[#allocation2 + $0x30] sm:$0xff]
    %1239 = vmatpush.msra.mxu0 0.0
    %1240 = vmatpush.msra.mxu0 0.0
    %1241 = vmatpush.msra.mxu0 0.0
    %1242 = vmatpush.msra.mxu0 0.0
    %1243 = vmatpush.msra.mxu0 0.0
    %1244 = vmatpush.msra.mxu0 0.0
    %1245 = vmatpush.msra.mxu0 0.0
    %1246 = vmatpush.msra.mxu0 0.0
    %1247 = vmatpush.msra.mxu0 0.0
    %1248 = vmatpush.msra.mxu0 0.0
    %1249 = vmatpush.msra.mxu0 0.0
    %1250 = vmatpush.msra.mxu0 0.0
    %1251 = vmatpush.msra.mxu0 %v278
    %1252 = vmatpush.msra.mxu0 %v277
    %1253 = vmatpush.msra.mxu0 %v276
    %1254 = vmatpush.msra.mxu0 %v275
    %1255 = vmatmul.f32.gmra.mxu0 %v1149
    %v1256 = vpop.f32.mrf.mxu0
    %v1257 = vadd.f32 0.0, %v1256
    %1258 = vdwg.mxu0
    %v1259 = vadd.f32 %v1238, %v1257
    %v1260 = vxor.u32 %v1259, 2147483648
    %v1261 = vmul.f32 %v1260, 1.442695
    %v1262 = vpow.pop %v1261
    %v1263 = vadd.f32 %v1262, 1.0
    %v1264 = vrcp.pop %v1263
    %v1265 = vmul.f32 %v1263, %v1264
    %v1266 = vsub.f32 1.0, %v1265
    %v1267 = vmul.f32 %v1264, %v1266
    %v1268 = vadd.f32 %v1264, %v1267
    %vm1269 = vweird.f32 %v1263
    %vm1270 = vweird.f32 %v1264
    %vm1271 = vmor %vm1269, %vm1270
    %v1272 = vsel %vm1271, %v1264, %v1268
    %v1273 = vand.u32 2147483647, %v1263
    %vm1274 = vcmp.eq.f32.partialorder %v1273, 8.507059e+37
    %v1275 = vand.u32 %v1263, 2147483648
    %v1276 = vor.u32 1.1754944e-38, %v1275
    %v1277 = vsel %vm1274, %v1276, %v1272
    %v1278 = vmul.f32 1.0, %v1277
    %v1279 = vadd.f32 %v1257, %v349
    %1281 = vrot.lane.b32.xlu0 %v1279, 64
    %v1282 = vpop.permute.xlu0 %1281
    %v1284 = vmul.f32 %v1278, %v1282
    %1286 = vrot.lane.b32.xlu0 %v1284, 64
    %v1287 = vpop.permute.xlu0 %1286
    %v1289 = vadd.f32 %v1238, %v1287
    %v1290 = vtanh.pop %v1289
    %v1291 = vsub.f32 1.0, %v1278
    %1293 = vrot.lane.b32.xlu0 %v1290, 96
    %v1294 = vpop.permute.xlu0 %1293
    %v1296 = vmul.f32 %v1291, %v1294
    %v1297 = vmul.f32 %v1278, %v1145
    %v1298 = vadd.f32 %v1296, %v1297
    %1300 = vrot.lane.b32.xlu0 %v1298, 96
    %v1301 = vpop.permute.xlu0 %1300
    %v1302 = vsel %vm200, %v1301, 0
    %1304 = vmatpush.msra.mxu0 0.0
    %1305 = vmatpush.msra.mxu0 0.0
    %1306 = vmatpush.msra.mxu0 0.0
    %1307 = vmatpush.msra.mxu0 0.0
    %1308 = vmatpush.msra.mxu0 0.0
    %1309 = vmatpush.msra.mxu0 0.0
    %1310 = vmatpush.msra.mxu0 0.0
    %1311 = vmatpush.msra.mxu0 0.0
    %1312 = vmatpush.msra.mxu0 0.0
    %1313 = vmatpush.msra.mxu0 0.0
    %1314 = vmatpush.msra.mxu0 0.0
    %1315 = vmatpush.msra.mxu0 0.0
    %1316 = vmatpush.msra.mxu0 %v288
    %1317 = vmatpush.msra.mxu0 %v287
    %1318 = vmatpush.msra.mxu0 %v286
    %1319 = vmatpush.msra.mxu0 %v285
    %1320 = vmatmul.f32.gmra.mxu0 %v1302
    %v1321 = vpop.f32.mrf.mxu0
    %v1322 = vadd.f32 %v292, %v1321
    %1323 = vdwg.mxu0
    %v1324 = vsel %vm200, %v1235, 0
    %1326 = vmatpush.msra.mxu0 0.0
    %1327 = vmatpush.msra.mxu0 0.0
    %1328 = vmatpush.msra.mxu0 0.0
    %1329 = vmatpush.msra.mxu0 0.0
    %1330 = vmatpush.msra.mxu0 0.0
    %1331 = vmatpush.msra.mxu0 0.0
    %1332 = vmatpush.msra.mxu0 0.0
    %1333 = vmatpush.msra.mxu0 0.0
    %1334 = vmatpush.msra.mxu0 0.0
    %1335 = vmatpush.msra.mxu0 0.0
    %1336 = vmatpush.msra.mxu0 0.0
    %1337 = vmatpush.msra.mxu0 0.0
    %1338 = vmatpush.msra.mxu0 %v283
    %1339 = vmatpush.msra.mxu0 %v282
    %1340 = vmatpush.msra.mxu0 %v281
    %1341 = vmatpush.msra.mxu0 %v280
    %1342 = vmatmul.f32.gmra.mxu0 %v1324
    %v1343 = vpop.f32.mrf.mxu0
    %v1344 = vadd.f32 0.0, %v1343
    %1345 = vdwg.mxu0
    %v1346 = vadd.f32 %v1322, %v1344
    %v1347 = vxor.u32 %v1346, 2147483648
    %v1348 = vmul.f32 %v1347, 1.442695
    %v1349 = vpow.pop %v1348
    %v1350 = vadd.f32 %v1349, 1.0
    %v1351 = vrcp.pop %v1350
    %v1352 = vmul.f32 %v1350, %v1351
    %v1353 = vsub.f32 1.0, %v1352
    %v1354 = vmul.f32 %v1351, %v1353
    %v1355 = vadd.f32 %v1351, %v1354
    %vm1356 = vweird.f32 %v1350
    %vm1357 = vweird.f32 %v1351
    %vm1358 = vmor %vm1356, %vm1357
    %v1359 = vsel %vm1358, %v1351, %v1355
    %v1360 = vand.u32 2147483647, %v1350
    %vm1361 = vcmp.eq.f32.partialorder %v1360, 8.507059e+37
    %v1362 = vand.u32 %v1350, 2147483648
    %v1363 = vor.u32 1.1754944e-38, %v1362
    %v1364 = vsel %vm1361, %v1363, %v1359
    %v1365 = vmul.f32 1.0, %v1364
    %v1366 = vadd.f32 %v1344, %v443
    %1368 = vrot.lane.b32.xlu0 %v1366, 64
    %v1369 = vpop.permute.xlu0 %1368
    %v1371 = vmul.f32 %v1365, %v1369
    %1373 = vrot.lane.b32.xlu0 %v1371, 64
    %v1374 = vpop.permute.xlu0 %1373
    %v1376 = vadd.f32 %v1322, %v1374
    %v1377 = vtanh.pop %v1376
    %v1378 = vsub.f32 1.0, %v1365
    %1380 = vrot.lane.b32.xlu0 %v1377, 96
    %v1381 = vpop.permute.xlu0 %1380
    %v1383 = vmul.f32 %v1378, %v1381
    %v1384 = vmul.f32 %v1365, %v1232
    %v1385 = vadd.f32 %v1383, %v1384
    %1387 = vrot.lane.b32.xlu0 %v1385, 96
    %v1388 = vpop.permute.xlu0 %1387
    %1390 = vst.msk [vmem:[#allocation3 + $0x30] sm:$0xff] %vm200, %v1388
    %v1391 = vld [vmem:[#allocation2 + $0x38] sm:$0xff]
    %1392 = vmatpush.msra.mxu0 0.0
    %1393 = vmatpush.msra.mxu0 0.0
    %1394 = vmatpush.msra.mxu0 0.0
    %1395 = vmatpush.msra.mxu0 0.0
    %1396 = vmatpush.msra.mxu0 0.0
    %1397 = vmatpush.msra.mxu0 0.0
    %1398 = vmatpush.msra.mxu0 0.0
    %1399 = vmatpush.msra.mxu0 0.0
    %1400 = vmatpush.msra.mxu0 0.0
    %1401 = vmatpush.msra.mxu0 0.0
    %1402 = vmatpush.msra.mxu0 0.0
    %1403 = vmatpush.msra.mxu0 0.0
    %1404 = vmatpush.msra.mxu0 %v278
    %1405 = vmatpush.msra.mxu0 %v277
    %1406 = vmatpush.msra.mxu0 %v276
    %1407 = vmatpush.msra.mxu0 %v275
    %1408 = vmatmul.f32.gmra.mxu0 %v1302
    %v1409 = vpop.f32.mrf.mxu0
    %v1410 = vadd.f32 0.0, %v1409
    %1411 = vdwg.mxu0
    %v1412 = vadd.f32 %v1391, %v1410
    %v1413 = vxor.u32 %v1412, 2147483648
    %v1414 = vmul.f32 %v1413, 1.442695
    %v1415 = vpow.pop %v1414
    %v1416 = vadd.f32 %v1415, 1.0
    %v1417 = vrcp.pop %v1416
    %v1418 = vmul.f32 %v1416, %v1417
    %v1419 = vsub.f32 1.0, %v1418
    %v1420 = vmul.f32 %v1417, %v1419
    %v1421 = vadd.f32 %v1417, %v1420
    %vm1422 = vweird.f32 %v1416
    %vm1423 = vweird.f32 %v1417
    %vm1424 = vmor %vm1422, %vm1423
    %v1425 = vsel %vm1424, %v1417, %v1421
    %v1426 = vand.u32 2147483647, %v1416
    %vm1427 = vcmp.eq.f32.partialorder %v1426, 8.507059e+37
    %v1428 = vand.u32 %v1416, 2147483648
    %v1429 = vor.u32 1.1754944e-38, %v1428
    %v1430 = vsel %vm1427, %v1429, %v1425
    %v1431 = vmul.f32 1.0, %v1430
    %v1432 = vadd.f32 %v1410, %v349
    %1434 = vrot.lane.b32.xlu0 %v1432, 64
    %v1435 = vpop.permute.xlu0 %1434
    %v1437 = vmul.f32 %v1431, %v1435
    %1439 = vrot.lane.b32.xlu0 %v1437, 64
    %v1440 = vpop.permute.xlu0 %1439
    %v1442 = vadd.f32 %v1391, %v1440
    %v1443 = vtanh.pop %v1442
    %v1444 = vsub.f32 1.0, %v1431
    %1446 = vrot.lane.b32.xlu0 %v1443, 96
    %v1447 = vpop.permute.xlu0 %1446
    %v1449 = vmul.f32 %v1444, %v1447
    %v1450 = vmul.f32 %v1431, %v1298
    %v1451 = vadd.f32 %v1449, %v1450
    %1453 = vrot.lane.b32.xlu0 %v1451, 96
    %v1454 = vpop.permute.xlu0 %1453
    %v1455 = vsel %vm200, %v1454, 0
    %1457 = vmatpush.msra.mxu0 0.0
    %1458 = vmatpush.msra.mxu0 0.0
    %1459 = vmatpush.msra.mxu0 0.0
    %1460 = vmatpush.msra.mxu0 0.0
    %1461 = vmatpush.msra.mxu0 0.0
    %1462 = vmatpush.msra.mxu0 0.0
    %1463 = vmatpush.msra.mxu0 0.0
    %1464 = vmatpush.msra.mxu0 0.0
    %1465 = vmatpush.msra.mxu0 0.0
    %1466 = vmatpush.msra.mxu0 0.0
    %1467 = vmatpush.msra.mxu0 0.0
    %1468 = vmatpush.msra.mxu0 0.0
    %1469 = vmatpush.msra.mxu0 %v288
    %1470 = vmatpush.msra.mxu0 %v287
    %1471 = vmatpush.msra.mxu0 %v286
    %1472 = vmatpush.msra.mxu0 %v285
    %1473 = vmatmul.f32.gmra.mxu0 %v1455
    %v1474 = vpop.f32.mrf.mxu0
    %v1475 = vadd.f32 %v292, %v1474
    %1476 = vdwg.mxu0
    %v1477 = vsel %vm200, %v1388, 0
    %1479 = vmatpush.msra.mxu0 0.0
    %1480 = vmatpush.msra.mxu0 0.0
    %1481 = vmatpush.msra.mxu0 0.0
    %1482 = vmatpush.msra.mxu0 0.0
    %1483 = vmatpush.msra.mxu0 0.0
    %1484 = vmatpush.msra.mxu0 0.0
    %1485 = vmatpush.msra.mxu0 0.0
    %1486 = vmatpush.msra.mxu0 0.0
    %1487 = vmatpush.msra.mxu0 0.0
    %1488 = vmatpush.msra.mxu0 0.0
    %1489 = vmatpush.msra.mxu0 0.0
    %1490 = vmatpush.msra.mxu0 0.0
    %1491 = vmatpush.msra.mxu0 %v283
    %1492 = vmatpush.msra.mxu0 %v282
    %1493 = vmatpush.msra.mxu0 %v281
    %1494 = vmatpush.msra.mxu0 %v280
    %1495 = vmatmul.f32.gmra.mxu0 %v1477
    %v1496 = vpop.f32.mrf.mxu0
    %v1497 = vadd.f32 0.0, %v1496
    %1498 = vdwg.mxu0
    %v1499 = vadd.f32 %v1475, %v1497
    %v1500 = vxor.u32 %v1499, 2147483648
    %v1501 = vmul.f32 %v1500, 1.442695
    %v1502 = vpow.pop %v1501
    %v1503 = vadd.f32 %v1502, 1.0
    %v1504 = vrcp.pop %v1503
    %v1505 = vmul.f32 %v1503, %v1504
    %v1506 = vsub.f32 1.0, %v1505
    %v1507 = vmul.f32 %v1504, %v1506
    %v1508 = vadd.f32 %v1504, %v1507
    %vm1509 = vweird.f32 %v1503
    %vm1510 = vweird.f32 %v1504
    %vm1511 = vmor %vm1509, %vm1510
    %v1512 = vsel %vm1511, %v1504, %v1508
    %v1513 = vand.u32 2147483647, %v1503
    %vm1514 = vcmp.eq.f32.partialorder %v1513, 8.507059e+37
    %v1515 = vand.u32 %v1503, 2147483648
    %v1516 = vor.u32 1.1754944e-38, %v1515
    %v1517 = vsel %vm1514, %v1516, %v1512
    %v1518 = vmul.f32 1.0, %v1517
    %v1519 = vadd.f32 %v1497, %v443
    %1521 = vrot.lane.b32.xlu0 %v1519, 64
    %v1522 = vpop.permute.xlu0 %1521
    %v1524 = vmul.f32 %v1518, %v1522
    %1526 = vrot.lane.b32.xlu0 %v1524, 64
    %v1527 = vpop.permute.xlu0 %1526
    %v1529 = vadd.f32 %v1475, %v1527
    %v1530 = vtanh.pop %v1529
    %v1531 = vsub.f32 1.0, %v1518
    %1533 = vrot.lane.b32.xlu0 %v1530, 96
    %v1534 = vpop.permute.xlu0 %1533
    %v1536 = vmul.f32 %v1531, %v1534
    %v1537 = vmul.f32 %v1518, %v1385
    %v1538 = vadd.f32 %v1536, %v1537
    %1540 = vrot.lane.b32.xlu0 %v1538, 96
    %v1541 = vpop.permute.xlu0 %1540
    %1543 = vst.msk [vmem:[#allocation3 + $0x38] sm:$0xff] %vm200, %v1541
    %1545 = vst.msk [vmem:[#allocation13] sm:$0xff] %vm200, %v1454
    %s1546 = scalar_lea.vmem [#allocation13], 8
    %1547 = vst.msk [vmem:[%s1546] sm:$0xff] %vm200, %v1541
    %v1548 = vld [vmem:[#allocation3] sm:$0xff]
    %v1549 = vld [vmem:[#allocation3 + $0x8] sm:$0xff]
    %v1550 = vld [vmem:[#allocation3 + $0x10] sm:$0xff]
    %v1551 = vld [vmem:[#allocation3 + $0x18] sm:$0xff]
    %v1552 = vld [vmem:[#allocation3 + $0x20] sm:$0xff]
    %v1553 = vld [vmem:[#allocation3 + $0x28] sm:$0xff]
    %v1554 = vld [vmem:[#allocation3 + $0x30] sm:$0xff]
    %v1555 = vld [vmem:[#allocation3 + $0x38] sm:$0xff]
    %v1556 = vld [vmem:[#allocation9] sm:$0xff]
    %v1557 = vld [vmem:[#allocation9 + $0x8] sm:$0xff]
    %v1558 = vld [vmem:[#allocation9 + $0x10] sm:$0xff]
    %v1559 = vld [vmem:[#allocation9 + $0x18] sm:$0xff]
    %v1560 = vld [vmem:[%s8] sm:$0x1]
    %v1562 = vperm.slane %v1560, 0
    %v1565 = vsel %vm200, %v1548, 0
    %v1568 = vsel %vm200, %v1549, 0
    %v1571 = vsel %vm200, %v1550, 0
    %v1574 = vsel %vm200, %v1551, 0
    %v1577 = vsel %vm200, %v1552, 0
    %v1580 = vsel %vm200, %v1553, 0
    %v1583 = vsel %vm200, %v1554, 0
    %v1586 = vsel %vm200, %v1555, 0
    %1588 = vmatpush.msra.mxu0 0.0
    %1589 = vmatpush.msra.mxu0 0.0
    %1590 = vmatpush.msra.mxu0 0.0
    %1591 = vmatpush.msra.mxu0 0.0
    %1592 = vmatpush.msra.mxu0 0.0
    %1593 = vmatpush.msra.mxu0 0.0
    %1594 = vmatpush.msra.mxu0 0.0
    %1595 = vmatpush.msra.mxu0 0.0
    %1596 = vmatpush.msra.mxu0 0.0
    %1597 = vmatpush.msra.mxu0 0.0
    %1598 = vmatpush.msra.mxu0 0.0
    %1599 = vmatpush.msra.mxu0 0.0
    %1600 = vmatpush.msra.mxu0 %v1559
    %1601 = vmatpush.msra.mxu0 %v1558
    %1602 = vmatpush.msra.mxu0 %v1557
    %1603 = vmatpush.msra.mxu0 %v1556
    %1604 = vmatmul.f32.gmra.mxu0 %v1565
    %v1605 = vpop.f32.mrf.mxu0
    %v1606 = vadd.f32 %v1562, %v1605
    %1607 = vmatmul.f32.gmra.mxu0 %v1568
    %v1608 = vpop.f32.mrf.mxu0
    %v1609 = vadd.f32 %v1562, %v1608
    %1610 = vmatmul.f32.gmra.mxu0 %v1571
    %v1611 = vpop.f32.mrf.mxu0
    %v1612 = vadd.f32 %v1562, %v1611
    %1613 = vmatmul.f32.gmra.mxu0 %v1574
    %v1614 = vpop.f32.mrf.mxu0
    %v1615 = vadd.f32 %v1562, %v1614
    %1616 = vmatmul.f32.gmra.mxu0 %v1577
    %v1617 = vpop.f32.mrf.mxu0
    %v1618 = vadd.f32 %v1562, %v1617
    %1619 = vmatmul.f32.gmra.mxu0 %v1580
    %v1620 = vpop.f32.mrf.mxu0
    %v1621 = vadd.f32 %v1562, %v1620
    %1622 = vmatmul.f32.gmra.mxu0 %v1583
    %v1623 = vpop.f32.mrf.mxu0
    %v1624 = vadd.f32 %v1562, %v1623
    %1625 = vmatmul.f32.gmra.mxu0 %v1586
    %v1626 = vpop.f32.mrf.mxu0
    %v1627 = vadd.f32 %v1562, %v1626
    %1628 = vdwg.mxu0
    %1629 = vst [vmem:[#allocation12] sm:$0xff] %v1606
    %1630 = vst [vmem:[#allocation12 + $0x8] sm:$0xff] %v1609
    %1631 = vst [vmem:[#allocation12 + $0x10] sm:$0xff] %v1612
    %1632 = vst [vmem:[#allocation12 + $0x18] sm:$0xff] %v1615
    %1633 = vst [vmem:[#allocation12 + $0x20] sm:$0xff] %v1618
    %1634 = vst [vmem:[#allocation12 + $0x28] sm:$0xff] %v1621
    %1635 = vst [vmem:[#allocation12 + $0x30] sm:$0xff] %v1624
    %1636 = vst [vmem:[#allocation12 + $0x38] sm:$0xff] %v1627
    // Predicated region
    $region58: #{tpu_custom_call.1} parent=1 // pred_check
      _
    $region59: #{tpu_custom_call.1} parent=1 // pred_check_branch
      %1638 = sbr.rel (0) target = $region61
    $region60: #{tpu_custom_call.1} parent=1 // pred_region
      %1640 = vsyncadd [#allocation6], 0
      %s1641 = sshll.u32 [#allocation12], 4
      %s1642 = int_to_ptr.vmem [resolvable:$true] %s1641
      %s1643 = sshll.u32 %s10, 4
      %s1644 = int_to_ptr.hbm [resolvable:$true] %s1643
      %1649 = dma.vmem_to_hbm [thread:$0]  %s1642, 1024, %s1644, [#allocation6], 128, 128, 8
    $region61: #{tpu_custom_call.1} parent=1 // pred_fallthru
      _
    // Predicated region
    $region62: #{tpu_custom_call.1} parent=1 // pred_check
      _
    $region63: #{tpu_custom_call.1} parent=1 // pred_check_branch
      %1651 = sbr.rel (0) target = $region65
    $region64: #{tpu_custom_call.1} parent=1 // pred_region
      %1653 = vsyncadd [#allocation14], 0
      %s1654 = sshll.u32 [#allocation13], 4
      %s1655 = int_to_ptr.vmem [resolvable:$true] %s1654
      %s1656 = sshll.u32 %s11, 4
      %s1657 = int_to_ptr.hbm [resolvable:$true] %s1656
      %1662 = dma.vmem_to_hbm [thread:$0]  %s1655, 256, %s1657, [#allocation14], 128, 128, 8
    $region65: #{tpu_custom_call.1} parent=1 // pred_fallthru
      _
    // Predicated region
    $region66: #{tpu_custom_call.1} parent=1 // pred_check
      _
    $region67: #{tpu_custom_call.1} parent=1 // pred_check_branch
      %1664 = sbr.rel (0) target = $region69
    $region68: #{tpu_custom_call.1} parent=1 // pred_region
      %1666 = dma.done [#allocation6], 1024
    $region69: #{tpu_custom_call.1} parent=1 // pred_fallthru
      _
    // Predicated region
    $region70: #{tpu_custom_call.1} parent=1 // pred_check
      _
    $region71: #{tpu_custom_call.1} parent=1 // pred_check_branch
      %1668 = sbr.rel (0) target = $region73
    $region72: #{tpu_custom_call.1} parent=1 // pred_region
      %1670 = dma.done [#allocation14], 256
    $region73: #{tpu_custom_call.1} parent=1 // pred_fallthru
      _
    %1671 = vsyncpa [#allocation5], 1
    %1672 = vsyncpa [#allocation8], 1
    %1673 = vsyncpa [#allocation11], 1
    %1674 = vsyncpa [#allocation6], 1
    %1675 = vsyncpa [#allocation14], 1

</llo_original>
